<compile_context>
chip_gen: v7x
topology: tpu7x:2x2x1
jax: 0.10.0
libtpu: 0.0.40
codegen_flags: <defaults>
</compile_context>

<pallas_src>
import functools

import jax
import jax.numpy as jnp
from jax.experimental import pallas as pl
from jax.experimental.pallas import tpu as pltpu

_BN_EPS = 1e-5


def _banded_weights(w_hwio, width):
    """(3,3,Cin,Cout) HWIO -> (3, width*Cin, width*Cout) banded matrices.

    band[ky][u*Cin+ci, w*Cout+co] = w_hwio[ky, u-w+1, ci, co] when u-w+1 in
    {0,1,2} (zero otherwise), so `x_row_folded @ band[ky]` applies the three
    horizontal taps and the channel mixing of vertical tap ky in one lane-dense
    matmul, with the horizontal zero-padding absorbed into the band.
    """
    bands = []
    for ky in range(3):
        b = sum(jnp.kron(jnp.eye(width, k=1 - dx, dtype=jnp.float32),
                         w_hwio[ky, dx].astype(jnp.float32))
                for dx in range(3))
        bands.append(b)
    return jnp.stack(bands)                                   # (3, W*C, W*C)


def _resblock_kernel(c, x_ref, w1_ref, b1_ref, g1_ref, be1_ref,
                     w2_ref, b2_ref, g2_ref, be2_ref, out_ref, pad_ref):
    # x_ref : (N, H, W*C) folded NHWC input (lane = w*C + c)
    # w*_ref: (3, W*C, W*C) banded conv weights;  b*/g*/be*_ref: (1, W*C) lane-tiled
    # out   : (N*H/2, 2*W*C) lane-dense NHWC slab (= (16, 128) here)
    # pad   : (N, H+2, W*C) vertically zero-padded activation scratch
    n, h, wc = x_ref.shape
    rows = n * h
    inv_cnt = 1.0 / float(rows * (wc // c))                   # 1 / (N*H*W)

    # Channel reduce+broadcast projector: proj[l, m] = 1 iff l == m (mod C).
    # (row_sums @ proj) sums the W lanes of each channel and broadcasts the
    # per-channel total back to every lane of that channel in one op.
    li = jax.lax.broadcasted_iota(jnp.int32, (wc, wc), 0)
    lj = jax.lax.broadcasted_iota(jnp.int32, (wc, wc), 1)
    proj = jnp.where((li % c) == (lj % c), 1.0, 0.0).astype(jnp.float32)

    # Zero-fill the small padded scratch once with full-width stores; the two
    # halo rows per image then stay zero for both convolutions.
    pad_ref[...] = jnp.zeros(pad_ref.shape, jnp.float32)
    pad_ref[:, 1:h + 1, :] = x_ref[...].astype(jnp.float32)

    def conv3x3(band_ref, bias_ref):
        # 3x3 conv = 3 row-shifted dense matmuls, register-held f32 accumulator.
        acc = jnp.zeros((rows, wc), jnp.float32)
        for ky in range(3):
            lhs = pad_ref[:, ky:ky + h, :].reshape(rows, wc)
            acc = acc + jnp.dot(lhs, band_ref[ky],
                                preferred_element_type=jnp.float32)
        return acc + bias_ref[...]

    def bn_train(y, g_ref, be_ref):
        # BatchNorm2d, training mode: batch stats over N*H*W, biased variance.
        # Fused single pass (sum + sum-of-squares); clamp var >= 0 against f32
        # cancellation for near-constant channels.
        s1 = jnp.sum(y, axis=0, keepdims=True)                # (1, W*C)
        s2 = jnp.sum(y * y, axis=0, keepdims=True)            # (1, W*C)
        st = jnp.dot(jnp.concatenate([s1, s2], axis=0), proj,
                     preferred_element_type=jnp.float32)      # (2, W*C)
        mean = st[0:1, :] * inv_cnt
        var = jnp.maximum(st[1:2, :] * inv_cnt - mean * mean, 0.0)
        scale = jax.lax.rsqrt(var + _BN_EPS) * g_ref[...]
        return (y - mean) * scale + be_ref[...]

    # conv1 -> bn1 -> relu
    y = jnp.maximum(bn_train(conv3x3(w1_ref, b1_ref), g1_ref, be1_ref), 0.0)

    # Re-stage the interior only (halo already zero), then conv2 -> bn2.
    pad_ref[:, 1:h + 1, :] = y.reshape(n, h, wc)
    y = bn_train(conv3x3(w2_ref, b2_ref), g2_ref, be2_ref)

    # Residual add, then fold pairs of 64-lane rows into full 128-lane rows so
    # the store path is unmasked full-width vst (lane-dense NHWC slab).
    res = x_ref[...].reshape(rows, wc).astype(jnp.float32) + y
    half = res.reshape(rows // 2, 2, wc)
    out_ref[...] = jnp.concatenate([half[:, 0, :], half[:, 1, :]],
                                   axis=-1).astype(out_ref.dtype)


def resblock_forward(x_nchw, params):
    """x_nchw: (N, C, H, W) float32 (PyTorch layout).  Returns (N, C, H, W)."""
    n, c, hh, ww = x_nchw.shape
    wc = ww * c
    rows = n * hh
    assert rows % 2 == 0, "needs an even number of image rows for the 128-lane slab"

    # Interface layout plumbing (outside the kernel): NCHW -> folded NHWC.
    x_nhwc = jnp.transpose(x_nchw, (0, 2, 3, 1))
    x_fold = x_nhwc.reshape(n, hh, wc)                        # metadata-only

    band1 = _banded_weights(params["w1"], ww)
    band2 = _banded_weights(params["w2"], ww)
    tile = lambda v: jnp.tile(v.reshape(1, c).astype(jnp.float32), (1, ww))
    b1l, b2l = tile(params["b1"]), tile(params["b2"])
    g1l, be1l = tile(params["g1"]), tile(params["beta1"])
    g2l, be2l = tile(params["g2"]), tile(params["beta2"])

    vmem = pl.BlockSpec(memory_space=pltpu.MemorySpace.VMEM)
    out_slab = pl.pallas_call(
        functools.partial(_resblock_kernel, c),
        out_shape=jax.ShapeDtypeStruct((rows // 2, 2 * wc), x_nchw.dtype),
        in_specs=[vmem] * 9,
        out_specs=vmem,
        scratch_shapes=[pltpu.VMEM((n, hh + 2, wc), jnp.float32)],
    )(x_fold, band1, b1l, g1l, be1l, band2, b2l, g2l, be2l)

    out_nhwc = out_slab.reshape(n, hh, ww, c)                 # metadata-only
    return jnp.transpose(out_nhwc, (0, 3, 1, 2))


def _reference(x_nchw, params):
    """Pure-JAX reference of the PyTorch forward pass (training-mode BN)."""
    c = x_nchw.shape[1]
    x = jnp.transpose(x_nchw, (0, 2, 3, 1))                   # NHWC

    def conv(inp, wgt, bias):
        out = jax.lax.conv_general_dilated(
            inp, wgt, window_strides=(1, 1), padding="SAME",
            dimension_numbers=("NHWC", "HWIO", "NHWC"))
        return out + bias.reshape(1, 1, 1, c)

    def bn(y, g, b):
        mean = jnp.mean(y, axis=(0, 1, 2), keepdims=True)
        var = jnp.mean((y - mean) ** 2, axis=(0, 1, 2), keepdims=True)
        return (y - mean) * jax.lax.rsqrt(var + _BN_EPS) * g.reshape(1, 1, 1, c) \
            + b.reshape(1, 1, 1, c)

    y = conv(x, params["w1"], params["b1"])
    y = jnp.maximum(bn(y, params["g1"], params["beta1"]), 0.0)
    y = conv(y, params["w2"], params["b2"])
    y = bn(y, params["g2"], params["beta2"])
    return jnp.transpose(x + y, (0, 3, 1, 2))


def _init_params(key, c):
    # Conv weights stored as HWIO (a PyTorch (Cout,Cin,kh,kw) weight maps via
    # transpose(2, 3, 1, 0)); BatchNorm2d default init: weight=1, bias=0.
    k1, k2, k3, k4 = jax.random.split(key, 4)
    w1 = 0.1 * jax.random.normal(k1, (3, 3, c, c), jnp.float32)
    w2 = 0.1 * jax.random.normal(k2, (3, 3, c, c), jnp.float32)
    b1 = 0.1 * jax.random.normal(k3, (c,), jnp.float32)
    b2 = 0.1 * jax.random.normal(k4, (c,), jnp.float32)
    return {"w1": w1, "b1": b1, "g1": jnp.ones((c,), jnp.float32),
            "beta1": jnp.zeros((c,), jnp.float32),
            "w2": w2, "b2": b2, "g2": jnp.ones((c,), jnp.float32),
            "beta2": jnp.zeros((c,), jnp.float32)}


if __name__ == "__main__":
    N, C, H, W = 2, 4, 16, 16
    key = jax.random.PRNGKey(0)
    kx, kp = jax.random.split(key)
    x = jax.random.normal(kx, (N, C, H, W), jnp.float32)      # NCHW, as in PyTorch
    params = _init_params(kp, C)

    out = jax.block_until_ready(resblock_forward(x, params))
    ref = _reference(x, params)
    assert out.shape == (N, C, H, W)
    assert jnp.allclose(out, ref, rtol=1e-4, atol=1e-4), "mismatch vs JAX reference"

    print("KERNEL_OK")
</pallas_src>

<mosaic_0001>
module attributes {stable_mosaic.version = 11 : i64} {
  func.func @_resblock_kernel(%arg0: memref<2x16x64xf32, #tpu.memory_space<vmem>>, %arg1: memref<3x64x64xf32, #tpu.memory_space<vmem>>, %arg2: memref<1x64xf32, #tpu.memory_space<vmem>>, %arg3: memref<1x64xf32, #tpu.memory_space<vmem>>, %arg4: memref<1x64xf32, #tpu.memory_space<vmem>>, %arg5: memref<3x64x64xf32, #tpu.memory_space<vmem>>, %arg6: memref<1x64xf32, #tpu.memory_space<vmem>>, %arg7: memref<1x64xf32, #tpu.memory_space<vmem>>, %arg8: memref<1x64xf32, #tpu.memory_space<vmem>>, %arg9: memref<16x128xf32, #tpu.memory_space<vmem>>, %arg10: memref<2x18x64xf32, #tpu.memory_space<vmem>>) attributes {dimension_semantics = [], scalar_prefetch = 0 : i64, scratch_operands = 1 : i64, tpu.core_type = #tpu.core_type<tc>} {
    %0 = tpu.iota {dimensions = array<i32: 0>} : vector<64x64xi32>
    %1 = tpu.iota {dimensions = array<i32: 1>} : vector<64x64xi32>
    %c4_i32 = arith.constant 4 : i32
    %c0_i32 = arith.constant 0 : i32
    %2 = arith.cmpi eq, %c4_i32, %c0_i32 : i32
    %c1_i32 = arith.constant 1 : i32
    %3 = arith.select %2, %c1_i32, %c4_i32 : i32
    %4 = vector.broadcast %3 : i32 to vector<64x64xi32>
    %5 = arith.remsi %0, %4 : vector<64x64xi32>
    %c0_i32_0 = arith.constant 0 : i32
    %6 = vector.broadcast %c0_i32_0 : i32 to vector<64x64xi32>
    %7 = arith.cmpi ne, %5, %6 : vector<64x64xi32>
    %c0_i32_1 = arith.constant 0 : i32
    %8 = vector.broadcast %c0_i32_1 : i32 to vector<64x64xi32>
    %9 = arith.cmpi slt, %5, %8 : vector<64x64xi32>
    %c0_i32_2 = arith.constant 0 : i32
    %10 = arith.cmpi slt, %3, %c0_i32_2 : i32
    %11 = vector.broadcast %10 : i1 to vector<64x64xi1>
    %12 = vector.broadcast %11 : vector<64x64xi1> to vector<64x64xi1>
    %13 = arith.xori %9, %12 : vector<64x64xi1>
    %14 = arith.andi %13, %7 : vector<64x64xi1>
    %15 = vector.broadcast %3 : i32 to vector<64x64xi32>
    %16 = arith.addi %5, %15 : vector<64x64xi32>
    %17 = arith.select %14, %16, %5 : vector<64x64xi1>, vector<64x64xi32>
    %c4_i32_3 = arith.constant 4 : i32
    %c0_i32_4 = arith.constant 0 : i32
    %18 = arith.cmpi eq, %c4_i32_3, %c0_i32_4 : i32
    %c1_i32_5 = arith.constant 1 : i32
    %19 = arith.select %18, %c1_i32_5, %c4_i32_3 : i32
    %20 = vector.broadcast %19 : i32 to vector<64x64xi32>
    %21 = arith.remsi %1, %20 : vector<64x64xi32>
    %c0_i32_6 = arith.constant 0 : i32
    %22 = vector.broadcast %c0_i32_6 : i32 to vector<64x64xi32>
    %23 = arith.cmpi ne, %21, %22 : vector<64x64xi32>
    %c0_i32_7 = arith.constant 0 : i32
    %24 = vector.broadcast %c0_i32_7 : i32 to vector<64x64xi32>
    %25 = arith.cmpi slt, %21, %24 : vector<64x64xi32>
    %c0_i32_8 = arith.constant 0 : i32
    %26 = arith.cmpi slt, %19, %c0_i32_8 : i32
    %27 = vector.broadcast %26 : i1 to vector<64x64xi1>
    %28 = vector.broadcast %27 : vector<64x64xi1> to vector<64x64xi1>
    %29 = arith.xori %25, %28 : vector<64x64xi1>
    %30 = arith.andi %29, %23 : vector<64x64xi1>
    %31 = vector.broadcast %19 : i32 to vector<64x64xi32>
    %32 = arith.addi %21, %31 : vector<64x64xi32>
    %33 = arith.select %30, %32, %21 : vector<64x64xi1>, vector<64x64xi32>
    %34 = arith.cmpi eq, %17, %33 : vector<64x64xi32>
    %cst = arith.constant 1.000000e+00 : f32
    %cst_9 = arith.constant 0.000000e+00 : f32
    %35 = vector.broadcast %cst : f32 to vector<64x64xf32>
    %36 = vector.broadcast %cst_9 : f32 to vector<64x64xf32>
    %37 = arith.select %34, %35, %36 : vector<64x64xi1>, vector<64x64xf32>
    %cst_10 = arith.constant 0.000000e+00 : f32
    %38 = vector.broadcast %cst_10 : f32 to vector<2x18x64xf32>
    %c0 = arith.constant 0 : index
    %c0_11 = arith.constant 0 : index
    %c0_12 = arith.constant 0 : index
    %39 = vector.load %arg10[%c0, %c0_11, %c0_12] : memref<2x18x64xf32, #tpu.memory_space<vmem>>, vector<2x18x64xf32>
    tpu.vector_store %arg10[%c0, %c0_11, %c0_12], %38 {strides = array<i32>} : memref<2x18x64xf32, #tpu.memory_space<vmem>>, vector<2x18x64xf32>,
    %c0_13 = arith.constant 0 : index
    %c0_14 = arith.constant 0 : index
    %c0_15 = arith.constant 0 : index
    %40 = vector.load %arg0[%c0_13, %c0_14, %c0_15] : memref<2x16x64xf32, #tpu.memory_space<vmem>>, vector<2x16x64xf32>
    %c0_16 = arith.constant 0 : index
    %c1 = arith.constant 1 : index
    %c0_17 = arith.constant 0 : index
    %41 = vector.load %arg10[%c0_16, %c1, %c0_17] : memref<2x18x64xf32, #tpu.memory_space<vmem>>, vector<2x16x64xf32>
    tpu.vector_store %arg10[%c0_16, %c1, %c0_17], %40 {strides = array<i32>} : memref<2x18x64xf32, #tpu.memory_space<vmem>>, vector<2x16x64xf32>,
    %cst_18 = arith.constant 0.000000e+00 : f32
    %42 = vector.broadcast %cst_18 : f32 to vector<32x64xf32>
    %c0_19 = arith.constant 0 : index
    %c0_20 = arith.constant 0 : index
    %c0_21 = arith.constant 0 : index
    %43 = vector.load %arg10[%c0_19, %c0_20, %c0_21] : memref<2x18x64xf32, #tpu.memory_space<vmem>>, vector<2x16x64xf32>
    %44 = vector.shape_cast %43 : vector<2x16x64xf32> to vector<32x64xf32>
    %c0_22 = arith.constant 0 : index
    %c0_23 = arith.constant 0 : index
    %c0_24 = arith.constant 0 : index
    %45 = vector.load %arg1[%c0_22, %c0_23, %c0_24] : memref<3x64x64xf32, #tpu.memory_space<vmem>>, vector<1x64x64xf32>
    %46 = vector.shape_cast %45 : vector<1x64x64xf32> to vector<64x64xf32>
    %cst_25 = arith.constant dense<0.000000e+00> : vector<32x64xf32>
    %47 = tpu.matmul %44, %46, %cst_25 {dimension_numbers = #tpu.dot_dimension_numbers<[1], [0], [0], [1], [0, 0, 1, 1], [], []>} : vector<32x64xf32>, vector<64x64xf32>, vector<32x64xf32> -> vector<32x64xf32>
    %48 = arith.addf %42, %47 : vector<32x64xf32>
    %c0_26 = arith.constant 0 : index
    %c1_27 = arith.constant 1 : index
    %c0_28 = arith.constant 0 : index
    %49 = vector.load %arg10[%c0_26, %c1_27, %c0_28] : memref<2x18x64xf32, #tpu.memory_space<vmem>>, vector<2x16x64xf32>
    %50 = vector.shape_cast %49 : vector<2x16x64xf32> to vector<32x64xf32>
    %c1_29 = arith.constant 1 : index
    %c0_30 = arith.constant 0 : index
    %c0_31 = arith.constant 0 : index
    %51 = vector.load %arg1[%c1_29, %c0_30, %c0_31] : memref<3x64x64xf32, #tpu.memory_space<vmem>>, vector<1x64x64xf32>
    %52 = vector.shape_cast %51 : vector<1x64x64xf32> to vector<64x64xf32>
    %cst_32 = arith.constant dense<0.000000e+00> : vector<32x64xf32>
    %53 = tpu.matmul %50, %52, %cst_32 {dimension_numbers = #tpu.dot_dimension_numbers<[1], [0], [0], [1], [0, 0, 1, 1], [], []>} : vector<32x64xf32>, vector<64x64xf32>, vector<32x64xf32> -> vector<32x64xf32>
    %54 = arith.addf %48, %53 : vector<32x64xf32>
    %c0_33 = arith.constant 0 : index
    %c2 = arith.constant 2 : index
    %c0_34 = arith.constant 0 : index
    %55 = vector.load %arg10[%c0_33, %c2, %c0_34] : memref<2x18x64xf32, #tpu.memory_space<vmem>>, vector<2x16x64xf32>
    %56 = vector.shape_cast %55 : vector<2x16x64xf32> to vector<32x64xf32>
    %c2_35 = arith.constant 2 : index
    %c0_36 = arith.constant 0 : index
    %c0_37 = arith.constant 0 : index
    %57 = vector.load %arg1[%c2_35, %c0_36, %c0_37] : memref<3x64x64xf32, #tpu.memory_space<vmem>>, vector<1x64x64xf32>
    %58 = vector.shape_cast %57 : vector<1x64x64xf32> to vector<64x64xf32>
    %cst_38 = arith.constant dense<0.000000e+00> : vector<32x64xf32>
    %59 = tpu.matmul %56, %58, %cst_38 {dimension_numbers = #tpu.dot_dimension_numbers<[1], [0], [0], [1], [0, 0, 1, 1], [], []>} : vector<32x64xf32>, vector<64x64xf32>, vector<32x64xf32> -> vector<32x64xf32>
    %60 = arith.addf %54, %59 : vector<32x64xf32>
    %c0_39 = arith.constant 0 : index
    %c0_40 = arith.constant 0 : index
    %61 = vector.load %arg2[%c0_39, %c0_40] : memref<1x64xf32, #tpu.memory_space<vmem>>, vector<1x64xf32>
    %62 = vector.broadcast %61 : vector<1x64xf32> to vector<32x64xf32>
    %63 = arith.addf %60, %62 : vector<32x64xf32>
    %cst_41 = arith.constant dense<0.000000e+00> : vector<64xf32>
    %64 = vector.multi_reduction <add>, %63, %cst_41 [0] : vector<32x64xf32> to vector<64xf32>
    %65 = vector.shape_cast %64 : vector<64xf32> to vector<1x64xf32>
    %66 = arith.mulf %63, %63 : vector<32x64xf32>
    %cst_42 = arith.constant dense<0.000000e+00> : vector<64xf32>
    %67 = vector.multi_reduction <add>, %66, %cst_42 [0] : vector<32x64xf32> to vector<64xf32>
    %68 = vector.shape_cast %67 : vector<64xf32> to vector<1x64xf32>
    %69 = tpu.concatenate %65, %68 in 0 : vector<1x64xf32>, vector<1x64xf32> -> vector<2x64xf32>
    %cst_43 = arith.constant dense<0.000000e+00> : vector<2x64xf32>
    %70 = tpu.matmul %69, %37, %cst_43 {dimension_numbers = #tpu.dot_dimension_numbers<[1], [0], [0], [1], [0, 0, 1, 1], [], []>} : vector<2x64xf32>, vector<64x64xf32>, vector<2x64xf32> -> vector<2x64xf32>
    %71 = vector.extract_strided_slice %70 {offsets = [0, 0], sizes = [1, 64], strides = [1, 1]} : vector<2x64xf32> to vector<1x64xf32>
    %cst_44 = arith.constant 0.001953125 : f32
    %72 = vector.broadcast %cst_44 : f32 to vector<1x64xf32>
    %73 = arith.mulf %71, %72 : vector<1x64xf32>
    %74 = vector.extract_strided_slice %70 {offsets = [1, 0], sizes = [1, 64], strides = [1, 1]} : vector<2x64xf32> to vector<1x64xf32>
    %cst_45 = arith.constant 0.001953125 : f32
    %75 = vector.broadcast %cst_45 : f32 to vector<1x64xf32>
    %76 = arith.mulf %74, %75 : vector<1x64xf32>
    %77 = arith.mulf %73, %73 : vector<1x64xf32>
    %78 = arith.subf %76, %77 : vector<1x64xf32>
    %cst_46 = arith.constant 0.000000e+00 : f32
    %79 = vector.broadcast %cst_46 : f32 to vector<1x64xf32>
    %80 = arith.maximumf %78, %79 : vector<1x64xf32>
    %cst_47 = arith.constant 9.99999974E-6 : f32
    %81 = vector.broadcast %cst_47 : f32 to vector<1x64xf32>
    %82 = arith.addf %80, %81 : vector<1x64xf32>
    %83 = math.rsqrt %82 : vector<1x64xf32>
    %c0_48 = arith.constant 0 : index
    %c0_49 = arith.constant 0 : index
    %84 = vector.load %arg3[%c0_48, %c0_49] : memref<1x64xf32, #tpu.memory_space<vmem>>, vector<1x64xf32>
    %85 = arith.mulf %83, %84 : vector<1x64xf32>
    %86 = vector.broadcast %73 : vector<1x64xf32> to vector<32x64xf32>
    %87 = arith.subf %63, %86 : vector<32x64xf32>
    %88 = vector.broadcast %85 : vector<1x64xf32> to vector<32x64xf32>
    %89 = arith.mulf %87, %88 : vector<32x64xf32>
    %c0_50 = arith.constant 0 : index
    %c0_51 = arith.constant 0 : index
    %90 = vector.load %arg4[%c0_50, %c0_51] : memref<1x64xf32, #tpu.memory_space<vmem>>, vector<1x64xf32>
    %91 = vector.broadcast %90 : vector<1x64xf32> to vector<32x64xf32>
    %92 = arith.addf %89, %91 : vector<32x64xf32>
    %cst_52 = arith.constant 0.000000e+00 : f32
    %93 = vector.broadcast %cst_52 : f32 to vector<32x64xf32>
    %94 = arith.maximumf %92, %93 : vector<32x64xf32>
    %95 = vector.shape_cast %94 : vector<32x64xf32> to vector<2x16x64xf32>
    %c0_53 = arith.constant 0 : index
    %c1_54 = arith.constant 1 : index
    %c0_55 = arith.constant 0 : index
    %96 = vector.load %arg10[%c0_53, %c1_54, %c0_55] : memref<2x18x64xf32, #tpu.memory_space<vmem>>, vector<2x16x64xf32>
    tpu.vector_store %arg10[%c0_53, %c1_54, %c0_55], %95 {strides = array<i32>} : memref<2x18x64xf32, #tpu.memory_space<vmem>>, vector<2x16x64xf32>,
    %cst_56 = arith.constant 0.000000e+00 : f32
    %97 = vector.broadcast %cst_56 : f32 to vector<32x64xf32>
    %c0_57 = arith.constant 0 : index
    %c0_58 = arith.constant 0 : index
    %c0_59 = arith.constant 0 : index
    %98 = vector.load %arg10[%c0_57, %c0_58, %c0_59] : memref<2x18x64xf32, #tpu.memory_space<vmem>>, vector<2x16x64xf32>
    %99 = vector.shape_cast %98 : vector<2x16x64xf32> to vector<32x64xf32>
    %c0_60 = arith.constant 0 : index
    %c0_61 = arith.constant 0 : index
    %c0_62 = arith.constant 0 : index
    %100 = vector.load %arg5[%c0_60, %c0_61, %c0_62] : memref<3x64x64xf32, #tpu.memory_space<vmem>>, vector<1x64x64xf32>
    %101 = vector.shape_cast %100 : vector<1x64x64xf32> to vector<64x64xf32>
    %cst_63 = arith.constant dense<0.000000e+00> : vector<32x64xf32>
    %102 = tpu.matmul %99, %101, %cst_63 {dimension_numbers = #tpu.dot_dimension_numbers<[1], [0], [0], [1], [0, 0, 1, 1], [], []>} : vector<32x64xf32>, vector<64x64xf32>, vector<32x64xf32> -> vector<32x64xf32>
    %103 = arith.addf %97, %102 : vector<32x64xf32>
    %c0_64 = arith.constant 0 : index
    %c1_65 = arith.constant 1 : index
    %c0_66 = arith.constant 0 : index
    %104 = vector.load %arg10[%c0_64, %c1_65, %c0_66] : memref<2x18x64xf32, #tpu.memory_space<vmem>>, vector<2x16x64xf32>
    %105 = vector.shape_cast %104 : vector<2x16x64xf32> to vector<32x64xf32>
    %c1_67 = arith.constant 1 : index
    %c0_68 = arith.constant 0 : index
    %c0_69 = arith.constant 0 : index
    %106 = vector.load %arg5[%c1_67, %c0_68, %c0_69] : memref<3x64x64xf32, #tpu.memory_space<vmem>>, vector<1x64x64xf32>
    %107 = vector.shape_cast %106 : vector<1x64x64xf32> to vector<64x64xf32>
    %cst_70 = arith.constant dense<0.000000e+00> : vector<32x64xf32>
    %108 = tpu.matmul %105, %107, %cst_70 {dimension_numbers = #tpu.dot_dimension_numbers<[1], [0], [0], [1], [0, 0, 1, 1], [], []>} : vector<32x64xf32>, vector<64x64xf32>, vector<32x64xf32> -> vector<32x64xf32>
    %109 = arith.addf %103, %108 : vector<32x64xf32>
    %c0_71 = arith.constant 0 : index
    %c2_72 = arith.constant 2 : index
    %c0_73 = arith.constant 0 : index
    %110 = vector.load %arg10[%c0_71, %c2_72, %c0_73] : memref<2x18x64xf32, #tpu.memory_space<vmem>>, vector<2x16x64xf32>
    %111 = vector.shape_cast %110 : vector<2x16x64xf32> to vector<32x64xf32>
    %c2_74 = arith.constant 2 : index
    %c0_75 = arith.constant 0 : index
    %c0_76 = arith.constant 0 : index
    %112 = vector.load %arg5[%c2_74, %c0_75, %c0_76] : memref<3x64x64xf32, #tpu.memory_space<vmem>>, vector<1x64x64xf32>
    %113 = vector.shape_cast %112 : vector<1x64x64xf32> to vector<64x64xf32>
    %cst_77 = arith.constant dense<0.000000e+00> : vector<32x64xf32>
    %114 = tpu.matmul %111, %113, %cst_77 {dimension_numbers = #tpu.dot_dimension_numbers<[1], [0], [0], [1], [0, 0, 1, 1], [], []>} : vector<32x64xf32>, vector<64x64xf32>, vector<32x64xf32> -> vector<32x64xf32>
    %115 = arith.addf %109, %114 : vector<32x64xf32>
    %c0_78 = arith.constant 0 : index
    %c0_79 = arith.constant 0 : index
    %116 = vector.load %arg6[%c0_78, %c0_79] : memref<1x64xf32, #tpu.memory_space<vmem>>, vector<1x64xf32>
    %117 = vector.broadcast %116 : vector<1x64xf32> to vector<32x64xf32>
    %118 = arith.addf %115, %117 : vector<32x64xf32>
    %cst_80 = arith.constant dense<0.000000e+00> : vector<64xf32>
    %119 = vector.multi_reduction <add>, %118, %cst_80 [0] : vector<32x64xf32> to vector<64xf32>
    %120 = vector.shape_cast %119 : vector<64xf32> to vector<1x64xf32>
    %121 = arith.mulf %118, %118 : vector<32x64xf32>
    %cst_81 = arith.constant dense<0.000000e+00> : vector<64xf32>
    %122 = vector.multi_reduction <add>, %121, %cst_81 [0] : vector<32x64xf32> to vector<64xf32>
    %123 = vector.shape_cast %122 : vector<64xf32> to vector<1x64xf32>
    %124 = tpu.concatenate %120, %123 in 0 : vector<1x64xf32>, vector<1x64xf32> -> vector<2x64xf32>
    %cst_82 = arith.constant dense<0.000000e+00> : vector<2x64xf32>
    %125 = tpu.matmul %124, %37, %cst_82 {dimension_numbers = #tpu.dot_dimension_numbers<[1], [0], [0], [1], [0, 0, 1, 1], [], []>} : vector<2x64xf32>, vector<64x64xf32>, vector<2x64xf32> -> vector<2x64xf32>
    %126 = vector.extract_strided_slice %125 {offsets = [0, 0], sizes = [1, 64], strides = [1, 1]} : vector<2x64xf32> to vector<1x64xf32>
    %cst_83 = arith.constant 0.001953125 : f32
    %127 = vector.broadcast %cst_83 : f32 to vector<1x64xf32>
    %128 = arith.mulf %126, %127 : vector<1x64xf32>
    %129 = vector.extract_strided_slice %125 {offsets = [1, 0], sizes = [1, 64], strides = [1, 1]} : vector<2x64xf32> to vector<1x64xf32>
    %cst_84 = arith.constant 0.001953125 : f32
    %130 = vector.broadcast %cst_84 : f32 to vector<1x64xf32>
    %131 = arith.mulf %129, %130 : vector<1x64xf32>
    %132 = arith.mulf %128, %128 : vector<1x64xf32>
    %133 = arith.subf %131, %132 : vector<1x64xf32>
    %cst_85 = arith.constant 0.000000e+00 : f32
    %134 = vector.broadcast %cst_85 : f32 to vector<1x64xf32>
    %135 = arith.maximumf %133, %134 : vector<1x64xf32>
    %cst_86 = arith.constant 9.99999974E-6 : f32
    %136 = vector.broadcast %cst_86 : f32 to vector<1x64xf32>
    %137 = arith.addf %135, %136 : vector<1x64xf32>
    %138 = math.rsqrt %137 : vector<1x64xf32>
    %c0_87 = arith.constant 0 : index
    %c0_88 = arith.constant 0 : index
    %139 = vector.load %arg7[%c0_87, %c0_88] : memref<1x64xf32, #tpu.memory_space<vmem>>, vector<1x64xf32>
    %140 = arith.mulf %138, %139 : vector<1x64xf32>
    %141 = vector.broadcast %128 : vector<1x64xf32> to vector<32x64xf32>
    %142 = arith.subf %118, %141 : vector<32x64xf32>
    %143 = vector.broadcast %140 : vector<1x64xf32> to vector<32x64xf32>
    %144 = arith.mulf %142, %143 : vector<32x64xf32>
    %c0_89 = arith.constant 0 : index
    %c0_90 = arith.constant 0 : index
    %145 = vector.load %arg8[%c0_89, %c0_90] : memref<1x64xf32, #tpu.memory_space<vmem>>, vector<1x64xf32>
    %146 = vector.broadcast %145 : vector<1x64xf32> to vector<32x64xf32>
    %147 = arith.addf %144, %146 : vector<32x64xf32>
    %c0_91 = arith.constant 0 : index
    %c0_92 = arith.constant 0 : index
    %c0_93 = arith.constant 0 : index
    %148 = vector.load %arg0[%c0_91, %c0_92, %c0_93] : memref<2x16x64xf32, #tpu.memory_space<vmem>>, vector<2x16x64xf32>
    %149 = vector.shape_cast %148 : vector<2x16x64xf32> to vector<32x64xf32>
    %150 = arith.addf %149, %147 : vector<32x64xf32>
    %151 = vector.shape_cast %150 : vector<32x64xf32> to vector<16x2x64xf32>
    %152 = vector.extract_strided_slice %151 {offsets = [0, 0, 0], sizes = [16, 1, 64], strides = [1, 1, 1]} : vector<16x2x64xf32> to vector<16x1x64xf32>
    %153 = vector.shape_cast %152 : vector<16x1x64xf32> to vector<16x64xf32>
    %154 = vector.extract_strided_slice %151 {offsets = [0, 1, 0], sizes = [16, 1, 64], strides = [1, 1, 1]} : vector<16x2x64xf32> to vector<16x1x64xf32>
    %155 = vector.shape_cast %154 : vector<16x1x64xf32> to vector<16x64xf32>
    %156 = tpu.concatenate %153, %155 in 1 : vector<16x64xf32>, vector<16x64xf32> -> vector<16x128xf32>
    %c0_94 = arith.constant 0 : index
    %c0_95 = arith.constant 0 : index
    %157 = vector.load %arg9[%c0_94, %c0_95] : memref<16x128xf32, #tpu.memory_space<vmem>>, vector<16x128xf32>
    tpu.vector_store %arg9[%c0_94, %c0_95], %156 {strides = array<i32>} : memref<16x128xf32, #tpu.memory_space<vmem>>, vector<16x128xf32>,
    return
  }
}

</mosaic_0001>

<llo_original>
// kernel: tpu_custom_call.1
$region0: #{tpu_custom_call.1}
  #allocation0 [shape = 'u32[]', space=smem, size = 0x4, offset = 0x4, fixed_abs, tag = 'smem constant byte address 0x4 - core index']
  #allocation1 [shape = 'u32[144,128]{1,0:T(1,128)}', space=vmem, size = 0x12000, scoped, tag = 'internal scratch']
  #allocation2 [shape = 'f32[2,18,64]{2,1,0:T(8,128)}', space=vmem, size = 0x6000, scoped, tag = 'scratch operand']
  %s0 = inlined_call_operand.hbm [shape: f32[2,16,64], index: 0, kind: input, shape index: {}]
  %s1 = inlined_call_operand.hbm [shape: f32[3,64,64], index: 1, kind: input, shape index: {}]
  %s2 = inlined_call_operand.vmem [shape: f32[1,64], index: 2, kind: input, shape index: {}]
  %s3 = inlined_call_operand.vmem [shape: f32[1,64], index: 3, kind: input, shape index: {}]
  %s4 = inlined_call_operand.vmem [shape: f32[1,64], index: 4, kind: input, shape index: {}]
  %s5 = inlined_call_operand.hbm [shape: f32[3,64,64], index: 5, kind: input, shape index: {}]
  %s6 = inlined_call_operand.vmem [shape: f32[1,64], index: 6, kind: input, shape index: {}]
  %s7 = inlined_call_operand.vmem [shape: f32[1,64], index: 7, kind: input, shape index: {}]
  %s8 = inlined_call_operand.vmem [shape: f32[1,64], index: 8, kind: input, shape index: {}]
  %s9 = inlined_call_operand.hbm [shape: f32[16,128], index: 9, kind: output, shape index: {}]
  %s10 = sld [smem:[#allocation0]]
  $region58: #{tpu_custom_call.1} parent=0
    _
  %s12 = ssub.s32 1, %s10
  %s13 = scalar_select 0, %s12, %s10
  $region1: #{tpu_custom_call.1} parent=0
    #allocation3 [shape = 'u8[16384]{0}', space=vmem, size = 0x4000, scoped, tag = 'input window, operand 0, single buffered']
    #allocation4 [shape = 's32[1]{0}', space=sflag, size = 0x4, scoped, tag = 'scoped memory for tpu_custom_call.1']
    #allocation5 [shape = 's32[1]{0}', space=sflag, size = 0x4, scoped, tag = 'scoped memory for tpu_custom_call.1']
    #allocation6 [shape = 'u8[98304]{0}', space=vmem, size = 0x18000, scoped, tag = 'input window, operand 1, single buffered']
    #allocation7 [shape = 's32[1]{0}', space=sflag, size = 0x4, scoped, tag = 'scoped memory for tpu_custom_call.1']
    #allocation8 [shape = 'u8[98304]{0}', space=vmem, size = 0x18000, scoped, tag = 'input window, operand 5, single buffered']
    #allocation9 [shape = 'u8[8192]{0}', space=vmem, size = 0x2000, scoped, tag = 'output window, operand 0, single buffered']
    %14 = vsyncpa [#allocation4], 0
    %15 = vsyncpa [#allocation7], 0
    %16 = vsyncpa [#allocation5], 0
    // Predicated region
    $region2: #{tpu_custom_call.1} parent=1 // pred_check
      _
    $region3: #{tpu_custom_call.1} parent=1 // pred_check_branch
      %18 = sbr.rel (0) target = $region5
    $region4: #{tpu_custom_call.1} parent=1 // pred_region
      %s20 = ssub.s32 512, 512
      %21 = vsyncadd [#allocation4], %s20
      %s22 = sshll.u32 [#allocation3], 4
      %s23 = int_to_ptr.vmem [resolvable:$true] %s22
      %28 = dma.hbm_to_vmem [thread:$0]  %s0, 512, %s23, [#allocation4], 128, 128, 8
    $region5: #{tpu_custom_call.1} parent=1 // pred_fallthru
      _
    // Predicated region
    $region6: #{tpu_custom_call.1} parent=1 // pred_check
      _
    $region7: #{tpu_custom_call.1} parent=1 // pred_check_branch
      %30 = sbr.rel (0) target = $region9
    $region8: #{tpu_custom_call.1} parent=1 // pred_region
      %s32 = ssub.s32 3072, 3072
      %33 = vsyncadd [#allocation7], %s32
      %s34 = sshll.u32 [#allocation6], 4
      %s35 = int_to_ptr.vmem [resolvable:$true] %s34
      %40 = dma.hbm_to_vmem [thread:$0]  %s1, 3072, %s35, [#allocation7], 128, 128, 8
    $region9: #{tpu_custom_call.1} parent=1 // pred_fallthru
      _
    // Predicated region
    $region10: #{tpu_custom_call.1} parent=1 // pred_check
      _
    $region11: #{tpu_custom_call.1} parent=1 // pred_check_branch
      %42 = sbr.rel (0) target = $region13
    $region12: #{tpu_custom_call.1} parent=1 // pred_region
      _
    $region13: #{tpu_custom_call.1} parent=1 // pred_fallthru
      _
    // Predicated region
    $region14: #{tpu_custom_call.1} parent=1 // pred_check
      _
    $region15: #{tpu_custom_call.1} parent=1 // pred_check_branch
      %44 = sbr.rel (0) target = $region17
    $region16: #{tpu_custom_call.1} parent=1 // pred_region
      _
    $region17: #{tpu_custom_call.1} parent=1 // pred_fallthru
      _
    // Predicated region
    $region18: #{tpu_custom_call.1} parent=1 // pred_check
      _
    $region19: #{tpu_custom_call.1} parent=1 // pred_check_branch
      %46 = sbr.rel (0) target = $region21
    $region20: #{tpu_custom_call.1} parent=1 // pred_region
      _
    $region21: #{tpu_custom_call.1} parent=1 // pred_fallthru
      _
    // Predicated region
    $region22: #{tpu_custom_call.1} parent=1 // pred_check
      _
    $region23: #{tpu_custom_call.1} parent=1 // pred_check_branch
      %48 = sbr.rel (0) target = $region25
    $region24: #{tpu_custom_call.1} parent=1 // pred_region
      %s50 = ssub.s32 3072, 3072
      %51 = vsyncadd [#allocation7], %s50
      %s52 = sshll.u32 [#allocation8], 4
      %s53 = int_to_ptr.vmem [resolvable:$true] %s52
      %58 = dma.hbm_to_vmem [thread:$0]  %s5, 3072, %s53, [#allocation7], 128, 128, 8
    $region25: #{tpu_custom_call.1} parent=1 // pred_fallthru
      _
    // Predicated region
    $region26: #{tpu_custom_call.1} parent=1 // pred_check
      _
    $region27: #{tpu_custom_call.1} parent=1 // pred_check_branch
      %60 = sbr.rel (0) target = $region29
    $region28: #{tpu_custom_call.1} parent=1 // pred_region
      _
    $region29: #{tpu_custom_call.1} parent=1 // pred_fallthru
      _
    // Predicated region
    $region30: #{tpu_custom_call.1} parent=1 // pred_check
      _
    $region31: #{tpu_custom_call.1} parent=1 // pred_check_branch
      %62 = sbr.rel (0) target = $region33
    $region32: #{tpu_custom_call.1} parent=1 // pred_region
      _
    $region33: #{tpu_custom_call.1} parent=1 // pred_fallthru
      _
    // Predicated region
    $region34: #{tpu_custom_call.1} parent=1 // pred_check
      _
    $region35: #{tpu_custom_call.1} parent=1 // pred_check_branch
      %64 = sbr.rel (0) target = $region37
    $region36: #{tpu_custom_call.1} parent=1 // pred_region
      _
    $region37: #{tpu_custom_call.1} parent=1 // pred_fallthru
      _
    // Predicated region
    $region38: #{tpu_custom_call.1} parent=1 // pred_check
      _
    $region39: #{tpu_custom_call.1} parent=1 // pred_check_branch
      %66 = sbr.rel (0) target = $region41
    $region40: #{tpu_custom_call.1} parent=1 // pred_region
      %67 = dma.done [#allocation4], 512
    $region41: #{tpu_custom_call.1} parent=1 // pred_fallthru
      _
    // Predicated region
    $region42: #{tpu_custom_call.1} parent=1 // pred_check
      _
    $region43: #{tpu_custom_call.1} parent=1 // pred_check_branch
      %69 = sbr.rel (0) target = $region45
    $region44: #{tpu_custom_call.1} parent=1 // pred_region
      %70 = dma.done [#allocation7], 3072
    $region45: #{tpu_custom_call.1} parent=1 // pred_fallthru
      _
    // Predicated region
    $region46: #{tpu_custom_call.1} parent=1 // pred_check
      _
    $region47: #{tpu_custom_call.1} parent=1 // pred_check_branch
      %72 = sbr.rel (0) target = $region49
    $region48: #{tpu_custom_call.1} parent=1 // pred_region
      %73 = dma.done [#allocation7], 3072
    $region49: #{tpu_custom_call.1} parent=1 // pred_fallthru
      _
    %v74 = vlaneseq
    %v75 = vshrl.u32 %v74, 7
    %v76 = vadd.s32 %v75, 8
    %v77 = vadd.s32 %v75, 16
    %v78 = vadd.s32 %v75, 24
    %v79 = vadd.s32 %v75, 32
    %v80 = vadd.s32 %v75, 40
    %v81 = vadd.s32 %v75, 48
    %v82 = vadd.s32 %v75, 56
    %v83 = vlaneseq
    %v84 = vand.u32 %v83, 127
    %vm85 = vcmp.lt.s32.totalorder %v75, 0
    %v86 = vsub.s32 0, %v75
    %v87 = vsel %vm85, %v86, %v75
    %v88 = vshrl.u32 %v87, 2
    %v89 = vand.u32 %v87, 3
    %v90 = vsub.s32 0, %v89
    %v91 = vsel %vm85, %v90, %v89
    %vm92 = vcmp.lt.s32.totalorder %v76, 0
    %v93 = vsub.s32 0, %v76
    %v94 = vsel %vm92, %v93, %v76
    %v95 = vshrl.u32 %v94, 2
    %v96 = vand.u32 %v94, 3
    %v97 = vsub.s32 0, %v96
    %v98 = vsel %vm92, %v97, %v96
    %vm99 = vcmp.lt.s32.totalorder %v77, 0
    %v100 = vsub.s32 0, %v77
    %v101 = vsel %vm99, %v100, %v77
    %v102 = vshrl.u32 %v101, 2
    %v103 = vand.u32 %v101, 3
    %v104 = vsub.s32 0, %v103
    %v105 = vsel %vm99, %v104, %v103
    %vm106 = vcmp.lt.s32.totalorder %v78, 0
    %v107 = vsub.s32 0, %v78
    %v108 = vsel %vm106, %v107, %v78
    %v109 = vshrl.u32 %v108, 2
    %v110 = vand.u32 %v108, 3
    %v111 = vsub.s32 0, %v110
    %v112 = vsel %vm106, %v111, %v110
    %vm113 = vcmp.lt.s32.totalorder %v79, 0
    %v114 = vsub.s32 0, %v79
    %v115 = vsel %vm113, %v114, %v79
    %v116 = vshrl.u32 %v115, 2
    %v117 = vand.u32 %v115, 3
    %v118 = vsub.s32 0, %v117
    %v119 = vsel %vm113, %v118, %v117
    %vm120 = vcmp.lt.s32.totalorder %v80, 0
    %v121 = vsub.s32 0, %v80
    %v122 = vsel %vm120, %v121, %v80
    %v123 = vshrl.u32 %v122, 2
    %v124 = vand.u32 %v122, 3
    %v125 = vsub.s32 0, %v124
    %v126 = vsel %vm120, %v125, %v124
    %vm127 = vcmp.lt.s32.totalorder %v81, 0
    %v128 = vsub.s32 0, %v81
    %v129 = vsel %vm127, %v128, %v81
    %v130 = vshrl.u32 %v129, 2
    %v131 = vand.u32 %v129, 3
    %v132 = vsub.s32 0, %v131
    %v133 = vsel %vm127, %v132, %v131
    %vm134 = vcmp.lt.s32.totalorder %v82, 0
    %v135 = vsub.s32 0, %v82
    %v136 = vsel %vm134, %v135, %v82
    %v137 = vshrl.u32 %v136, 2
    %v138 = vand.u32 %v136, 3
    %v139 = vsub.s32 0, %v138
    %v140 = vsel %vm134, %v139, %v138
    %vm141 = vcmp.ne.s32.totalorder %v91, 0
    %vm142 = vcmp.ne.s32.totalorder %v98, 0
    %vm143 = vcmp.ne.s32.totalorder %v105, 0
    %vm144 = vcmp.ne.s32.totalorder %v112, 0
    %vm145 = vcmp.ne.s32.totalorder %v119, 0
    %vm146 = vcmp.ne.s32.totalorder %v126, 0
    %vm147 = vcmp.ne.s32.totalorder %v133, 0
    %vm148 = vcmp.ne.s32.totalorder %v140, 0
    %vm149 = vcmp.lt.s32.totalorder %v91, 0
    %vm150 = vcmp.lt.s32.totalorder %v98, 0
    %vm151 = vcmp.lt.s32.totalorder %v105, 0
    %vm152 = vcmp.lt.s32.totalorder %v112, 0
    %vm153 = vcmp.lt.s32.totalorder %v119, 0
    %vm154 = vcmp.lt.s32.totalorder %v126, 0
    %vm155 = vcmp.lt.s32.totalorder %v133, 0
    %vm156 = vcmp.lt.s32.totalorder %v140, 0
    %vm157 = vmand %vm149, %vm141
    %vm158 = vmand %vm150, %vm142
    %vm159 = vmand %vm151, %vm143
    %vm160 = vmand %vm152, %vm144
    %vm161 = vmand %vm153, %vm145
    %vm162 = vmand %vm154, %vm146
    %vm163 = vmand %vm155, %vm147
    %vm164 = vmand %vm156, %vm148
    %v165 = vadd.s32 %v91, 4
    %v166 = vadd.s32 %v98, 4
    %v167 = vadd.s32 %v105, 4
    %v168 = vadd.s32 %v112, 4
    %v169 = vadd.s32 %v119, 4
    %v170 = vadd.s32 %v126, 4
    %v171 = vadd.s32 %v133, 4
    %v172 = vadd.s32 %v140, 4
    %v173 = vsel %vm157, %v165, %v91
    %v174 = vsel %vm158, %v166, %v98
    %v175 = vsel %vm159, %v167, %v105
    %v176 = vsel %vm160, %v168, %v112
    %v177 = vsel %vm161, %v169, %v119
    %v178 = vsel %vm162, %v170, %v126
    %v179 = vsel %vm163, %v171, %v133
    %v180 = vsel %vm164, %v172, %v140
    %vm181 = vcmp.lt.s32.totalorder %v84, 0
    %v182 = vsub.s32 0, %v84
    %v183 = vsel %vm181, %v182, %v84
    %v184 = vshrl.u32 %v183, 2
    %v185 = vand.u32 %v183, 3
    %v186 = vsub.s32 0, %v185
    %v187 = vsel %vm181, %v186, %v185
    %vm188 = vcmp.ne.s32.totalorder %v187, 0
    %vm189 = vcmp.lt.s32.totalorder %v187, 0
    %vm190 = vmand %vm189, %vm188
    %v191 = vadd.s32 %v187, 4
    %v192 = vsel %vm190, %v191, %v187
    %vm193 = vcmp.eq.s32.totalorder %v173, %v192
    %vm194 = vcmp.eq.s32.totalorder %v174, %v192
    %vm195 = vcmp.eq.s32.totalorder %v175, %v192
    %vm196 = vcmp.eq.s32.totalorder %v176, %v192
    %vm197 = vcmp.eq.s32.totalorder %v177, %v192
    %vm198 = vcmp.eq.s32.totalorder %v178, %v192
    %vm199 = vcmp.eq.s32.totalorder %v179, %v192
    %vm200 = vcmp.eq.s32.totalorder %v180, %v192
    %v201 = vsel %vm193, 1.0, 0.0
    %v202 = vsel %vm194, 1.0, 0.0
    %v203 = vsel %vm195, 1.0, 0.0
    %v204 = vsel %vm196, 1.0, 0.0
    %v205 = vsel %vm197, 1.0, 0.0
    %v206 = vsel %vm198, 1.0, 0.0
    %v207 = vsel %vm199, 1.0, 0.0
    %v208 = vsel %vm200, 1.0, 0.0
    %vm209 = vcmask 523264
    %210 = vst.msk [vmem:[#allocation2] sm:$0xff] %vm209, 0.0
    %211 = vst.msk [vmem:[#allocation2 + $0x8] sm:$0xff] %vm209, 0.0
    %vm212 = vcmask 517120
    %213 = vst.msk [vmem:[#allocation2 + $0x10] sm:$0x3] %vm212, 0.0
    %214 = vst.msk [vmem:[#allocation2 + $0x18] sm:$0xff] %vm209, 0.0
    %215 = vst.msk [vmem:[#allocation2 + $0x20] sm:$0xff] %vm209, 0.0
    %216 = vst.msk [vmem:[#allocation2 + $0x28] sm:$0x3] %vm212, 0.0
    %v217 = vld [vmem:[#allocation3] sm:$0xff]
    %v218 = vld [vmem:[#allocation3 + $0x8] sm:$0xff]
    %v219 = vld [vmem:[#allocation3 + $0x10] sm:$0xff]
    %v220 = vld [vmem:[#allocation3 + $0x18] sm:$0xff]
    %221 = vst.msk [vmem:[#allocation2 + $0x1] sm:$0xff] %vm209, %v217
    %222 = vst.msk [vmem:[#allocation2 + $0x9] sm:$0xff] %vm209, %v218
    %223 = vst.msk [vmem:[#allocation2 + $0x19] sm:$0xff] %vm209, %v219
    %224 = vst.msk [vmem:[#allocation2 + $0x21] sm:$0xff] %vm209, %v220
    %v225 = vld [vmem:[#allocation2] sm:$0xff]
    %v226 = vld [vmem:[#allocation2 + $0x8] sm:$0xff]
    %v227 = vld [vmem:[#allocation2 + $0x18] sm:$0xff]
    %v228 = vld [vmem:[#allocation2 + $0x20] sm:$0xff]
    %v229 = vld [vmem:[#allocation6] sm:$0xff]
    %v230 = vld [vmem:[#allocation6 + $0x8] sm:$0xff]
    %v231 = vld [vmem:[#allocation6 + $0x10] sm:$0xff]
    %v232 = vld [vmem:[#allocation6 + $0x18] sm:$0xff]
    %v233 = vld [vmem:[#allocation6 + $0x20] sm:$0xff]
    %v234 = vld [vmem:[#allocation6 + $0x28] sm:$0xff]
    %v235 = vld [vmem:[#allocation6 + $0x30] sm:$0xff]
    %v236 = vld [vmem:[#allocation6 + $0x38] sm:$0xff]
    %v237 = vld [vmem:[#allocation2 + $0x1] sm:$0xff]
    %v238 = vld [vmem:[#allocation2 + $0x9] sm:$0xff]
    %v239 = vld [vmem:[#allocation2 + $0x19] sm:$0xff]
    %v240 = vld [vmem:[#allocation2 + $0x21] sm:$0xff]
    %s241 = scalar_lea.vmem [#allocation6], 64
    %v242 = vld [vmem:[%s241] sm:$0xff]
    %v243 = vld [vmem:[%s241 + $0x8] sm:$0xff]
    %v244 = vld [vmem:[%s241 + $0x10] sm:$0xff]
    %v245 = vld [vmem:[%s241 + $0x18] sm:$0xff]
    %v246 = vld [vmem:[%s241 + $0x20] sm:$0xff]
    %v247 = vld [vmem:[%s241 + $0x28] sm:$0xff]
    %v248 = vld [vmem:[%s241 + $0x30] sm:$0xff]
    %v249 = vld [vmem:[%s241 + $0x38] sm:$0xff]
    %v251 = vsel %vm209, %v237, 0
    %v254 = vsel %vm209, %v238, 0
    %v257 = vsel %vm209, %v239, 0
    %v260 = vsel %vm209, %v240, 0
    %262 = vmatprep.subr.mxu0 0.0
    %263 = vmatpush1.msra.mxu0 %v242
    %264 = vmatprep.subr.mxu0 0.0
    %265 = vmatpush1.msra.mxu0 %v243
    %266 = vmatprep.subr.mxu0 0.0
    %267 = vmatpush1.msra.mxu0 %v244
    %268 = vmatprep.subr.mxu0 0.0
    %269 = vmatpush1.msra.mxu0 %v245
    %270 = vmatprep.subr.mxu0 0.0
    %271 = vmatpush1.msra.mxu0 %v246
    %272 = vmatprep.subr.mxu0 0.0
    %273 = vmatpush1.msra.mxu0 %v247
    %274 = vmatprep.subr.mxu0 0.0
    %275 = vmatpush1.msra.mxu0 %v248
    %276 = vmatprep.subr.mxu0 0.0
    %277 = vmatpush1.msra.mxu0 %v249
    %278 = vmatprep.subr.mxu0 0.0
    %279 = vmatpush1.msra.mxu0 0.0
    %280 = vmatprep.subr.mxu0 0.0
    %281 = vmatpush1.msra.mxu0 0.0
    %282 = vmatprep.subr.mxu0 0.0
    %283 = vmatpush1.msra.mxu0 0.0
    %284 = vmatprep.subr.mxu0 0.0
    %285 = vmatpush1.msra.mxu0 0.0
    %286 = vmatprep.subr.mxu0 0.0
    %287 = vmatpush1.msra.mxu0 0.0
    %288 = vmatprep.subr.mxu0 0.0
    %289 = vmatpush1.msra.mxu0 0.0
    %290 = vmatprep.subr.mxu0 0.0
    %291 = vmatpush1.msra.mxu0 0.0
    %292 = vmatprep.subr.mxu0 0.0
    %293 = vmatpush1.msra.mxu0 0.0
    %294 = vmatprep.subr.mxu0 0.0
    %295 = vmatpush1.msra.mxu0 0.0
    %296 = vmatprep.subr.mxu0 0.0
    %297 = vmatpush1.msra.mxu0 0.0
    %298 = vmatprep.subr.mxu0 0.0
    %299 = vmatpush1.msra.mxu0 0.0
    %300 = vmatprep.subr.mxu0 0.0
    %301 = vmatpush1.msra.mxu0 0.0
    %302 = vmatprep.subr.mxu0 0.0
    %303 = vmatpush1.msra.mxu0 0.0
    %304 = vmatprep.subr.mxu0 0.0
    %305 = vmatpush1.msra.mxu0 0.0
    %306 = vmatprep.subr.mxu0 0.0
    %307 = vmatpush1.msra.mxu0 0.0
    %308 = vmatprep.subr.mxu0 0.0
    %309 = vmatpush1.msra.mxu0 0.0
    %310 = vmatprep.subr.mxu0 0.0
    %311 = vmatpush1.msra.mxu0 0.0
    %312 = vmatprep.subr.mxu0 0.0
    %313 = vmatpush1.msra.mxu0 0.0
    %314 = vmatprep.subr.mxu0 0.0
    %315 = vmatpush1.msra.mxu0 0.0
    %316 = vmatprep.subr.mxu0 0.0
    %317 = vmatpush1.msra.mxu0 0.0
    %318 = vmatprep.subr.mxu0 0.0
    %319 = vmatpush1.msra.mxu0 0.0
    %320 = vmatprep.subr.mxu0 0.0
    %321 = vmatpush1.msra.mxu0 0.0
    %322 = vmatprep.subr.mxu0 0.0
    %323 = vmatpush1.msra.mxu0 0.0
    %324 = vmatprep.subr.mxu0 0.0
    %325 = vmatpush1.msra.mxu0 0.0
    %326 = vmatprep.mubr.f32.mxu0 0.0
    %327 = vmatmul.mubr.f32.gmra.mrb[0].mxu0 %v251
    %v328 = vpop.f32.mrb[0].mxu0
    %v329 = vadd.f32 0.0, %v328
    %v330 = vpop.f32.mrb[0].mxu0
    %331 = vmatprep.mubr.f32.mxu0 0.0
    %332 = vmatmul.mubr.f32.gmra.mrb[0].mxu0 %v254
    %v333 = vpop.f32.mrb[0].mxu0
    %v334 = vadd.f32 0.0, %v333
    %v335 = vpop.f32.mrb[0].mxu0
    %336 = vmatprep.mubr.f32.mxu0 0.0
    %337 = vmatmul.mubr.f32.gmra.mrb[0].mxu0 %v257
    %v338 = vpop.f32.mrb[0].mxu0
    %v339 = vadd.f32 0.0, %v338
    %v340 = vpop.f32.mrb[0].mxu0
    %341 = vmatprep.mubr.f32.mxu0 0.0
    %342 = vmatmul.mubr.f32.gmra.mrb[0].mxu0 %v260
    %v343 = vpop.f32.mrb[0].mxu0
    %v344 = vadd.f32 0.0, %v343
    %v345 = vpop.f32.mrb[0].mxu0
    %346 = vdwg.mxu0
    %v348 = vsel %vm209, %v225, 0
    %v351 = vsel %vm209, %v226, 0
    %v354 = vsel %vm209, %v227, 0
    %v357 = vsel %vm209, %v228, 0
    %359 = vmatprep.subr.mxu0 0.0
    %360 = vmatpush1.msra.mxu0 %v229
    %361 = vmatprep.subr.mxu0 0.0
    %362 = vmatpush1.msra.mxu0 %v230
    %363 = vmatprep.subr.mxu0 0.0
    %364 = vmatpush1.msra.mxu0 %v231
    %365 = vmatprep.subr.mxu0 0.0
    %366 = vmatpush1.msra.mxu0 %v232
    %367 = vmatprep.subr.mxu0 0.0
    %368 = vmatpush1.msra.mxu0 %v233
    %369 = vmatprep.subr.mxu0 0.0
    %370 = vmatpush1.msra.mxu0 %v234
    %371 = vmatprep.subr.mxu0 0.0
    %372 = vmatpush1.msra.mxu0 %v235
    %373 = vmatprep.subr.mxu0 0.0
    %374 = vmatpush1.msra.mxu0 %v236
    %375 = vmatprep.subr.mxu0 0.0
    %376 = vmatpush1.msra.mxu0 0.0
    %377 = vmatprep.subr.mxu0 0.0
    %378 = vmatpush1.msra.mxu0 0.0
    %379 = vmatprep.subr.mxu0 0.0
    %380 = vmatpush1.msra.mxu0 0.0
    %381 = vmatprep.subr.mxu0 0.0
    %382 = vmatpush1.msra.mxu0 0.0
    %383 = vmatprep.subr.mxu0 0.0
    %384 = vmatpush1.msra.mxu0 0.0
    %385 = vmatprep.subr.mxu0 0.0
    %386 = vmatpush1.msra.mxu0 0.0
    %387 = vmatprep.subr.mxu0 0.0
    %388 = vmatpush1.msra.mxu0 0.0
    %389 = vmatprep.subr.mxu0 0.0
    %390 = vmatpush1.msra.mxu0 0.0
    %391 = vmatprep.subr.mxu0 0.0
    %392 = vmatpush1.msra.mxu0 0.0
    %393 = vmatprep.subr.mxu0 0.0
    %394 = vmatpush1.msra.mxu0 0.0
    %395 = vmatprep.subr.mxu0 0.0
    %396 = vmatpush1.msra.mxu0 0.0
    %397 = vmatprep.subr.mxu0 0.0
    %398 = vmatpush1.msra.mxu0 0.0
    %399 = vmatprep.subr.mxu0 0.0
    %400 = vmatpush1.msra.mxu0 0.0
    %401 = vmatprep.subr.mxu0 0.0
    %402 = vmatpush1.msra.mxu0 0.0
    %403 = vmatprep.subr.mxu0 0.0
    %404 = vmatpush1.msra.mxu0 0.0
    %405 = vmatprep.subr.mxu0 0.0
    %406 = vmatpush1.msra.mxu0 0.0
    %407 = vmatprep.subr.mxu0 0.0
    %408 = vmatpush1.msra.mxu0 0.0
    %409 = vmatprep.subr.mxu0 0.0
    %410 = vmatpush1.msra.mxu0 0.0
    %411 = vmatprep.subr.mxu0 0.0
    %412 = vmatpush1.msra.mxu0 0.0
    %413 = vmatprep.subr.mxu0 0.0
    %414 = vmatpush1.msra.mxu0 0.0
    %415 = vmatprep.subr.mxu0 0.0
    %416 = vmatpush1.msra.mxu0 0.0
    %417 = vmatprep.subr.mxu0 0.0
    %418 = vmatpush1.msra.mxu0 0.0
    %419 = vmatprep.subr.mxu0 0.0
    %420 = vmatpush1.msra.mxu0 0.0
    %421 = vmatprep.subr.mxu0 0.0
    %422 = vmatpush1.msra.mxu0 0.0
    %423 = vmatprep.mubr.f32.mxu0 0.0
    %424 = vmatmul.mubr.f32.gmra.mrb[0].mxu0 %v348
    %v425 = vpop.f32.mrb[0].mxu0
    %v426 = vadd.f32 %v329, %v425
    %v427 = vpop.f32.mrb[0].mxu0
    %428 = vmatprep.mubr.f32.mxu0 0.0
    %429 = vmatmul.mubr.f32.gmra.mrb[0].mxu0 %v351
    %v430 = vpop.f32.mrb[0].mxu0
    %v431 = vadd.f32 %v334, %v430
    %v432 = vpop.f32.mrb[0].mxu0
    %433 = vmatprep.mubr.f32.mxu0 0.0
    %434 = vmatmul.mubr.f32.gmra.mrb[0].mxu0 %v354
    %v435 = vpop.f32.mrb[0].mxu0
    %v436 = vadd.f32 %v339, %v435
    %v437 = vpop.f32.mrb[0].mxu0
    %438 = vmatprep.mubr.f32.mxu0 0.0
    %439 = vmatmul.mubr.f32.gmra.mrb[0].mxu0 %v357
    %v440 = vpop.f32.mrb[0].mxu0
    %v441 = vadd.f32 %v344, %v440
    %v442 = vpop.f32.mrb[0].mxu0
    %443 = vdwg.mxu0
    %v444 = vld [vmem:[#allocation2 + $0x2] sm:$0xff]
    %v445 = vld [vmem:[#allocation2 + $0xa] sm:$0xff]
    %v446 = vld [vmem:[#allocation2 + $0x1a] sm:$0xff]
    %v447 = vld [vmem:[#allocation2 + $0x22] sm:$0xff]
    %s448 = scalar_lea.vmem [#allocation6], 128
    %v449 = vld [vmem:[%s448] sm:$0xff]
    %v450 = vld [vmem:[%s448 + $0x8] sm:$0xff]
    %v451 = vld [vmem:[%s448 + $0x10] sm:$0xff]
    %v452 = vld [vmem:[%s448 + $0x18] sm:$0xff]
    %v453 = vld [vmem:[%s448 + $0x20] sm:$0xff]
    %v454 = vld [vmem:[%s448 + $0x28] sm:$0xff]
    %v455 = vld [vmem:[%s448 + $0x30] sm:$0xff]
    %v456 = vld [vmem:[%s448 + $0x38] sm:$0xff]
    %v458 = vsel %vm209, %v444, 0
    %v461 = vsel %vm209, %v445, 0
    %v464 = vsel %vm209, %v446, 0
    %v467 = vsel %vm209, %v447, 0
    %469 = vmatprep.subr.mxu0 0.0
    %470 = vmatpush1.msra.mxu0 %v449
    %471 = vmatprep.subr.mxu0 0.0
    %472 = vmatpush1.msra.mxu0 %v450
    %473 = vmatprep.subr.mxu0 0.0
    %474 = vmatpush1.msra.mxu0 %v451
    %475 = vmatprep.subr.mxu0 0.0
    %476 = vmatpush1.msra.mxu0 %v452
    %477 = vmatprep.subr.mxu0 0.0
    %478 = vmatpush1.msra.mxu0 %v453
    %479 = vmatprep.subr.mxu0 0.0
    %480 = vmatpush1.msra.mxu0 %v454
    %481 = vmatprep.subr.mxu0 0.0
    %482 = vmatpush1.msra.mxu0 %v455
    %483 = vmatprep.subr.mxu0 0.0
    %484 = vmatpush1.msra.mxu0 %v456
    %485 = vmatprep.subr.mxu0 0.0
    %486 = vmatpush1.msra.mxu0 0.0
    %487 = vmatprep.subr.mxu0 0.0
    %488 = vmatpush1.msra.mxu0 0.0
    %489 = vmatprep.subr.mxu0 0.0
    %490 = vmatpush1.msra.mxu0 0.0
    %491 = vmatprep.subr.mxu0 0.0
    %492 = vmatpush1.msra.mxu0 0.0
    %493 = vmatprep.subr.mxu0 0.0
    %494 = vmatpush1.msra.mxu0 0.0
    %495 = vmatprep.subr.mxu0 0.0
    %496 = vmatpush1.msra.mxu0 0.0
    %497 = vmatprep.subr.mxu0 0.0
    %498 = vmatpush1.msra.mxu0 0.0
    %499 = vmatprep.subr.mxu0 0.0
    %500 = vmatpush1.msra.mxu0 0.0
    %501 = vmatprep.subr.mxu0 0.0
    %502 = vmatpush1.msra.mxu0 0.0
    %503 = vmatprep.subr.mxu0 0.0
    %504 = vmatpush1.msra.mxu0 0.0
    %505 = vmatprep.subr.mxu0 0.0
    %506 = vmatpush1.msra.mxu0 0.0
    %507 = vmatprep.subr.mxu0 0.0
    %508 = vmatpush1.msra.mxu0 0.0
    %509 = vmatprep.subr.mxu0 0.0
    %510 = vmatpush1.msra.mxu0 0.0
    %511 = vmatprep.subr.mxu0 0.0
    %512 = vmatpush1.msra.mxu0 0.0
    %513 = vmatprep.subr.mxu0 0.0
    %514 = vmatpush1.msra.mxu0 0.0
    %515 = vmatprep.subr.mxu0 0.0
    %516 = vmatpush1.msra.mxu0 0.0
    %517 = vmatprep.subr.mxu0 0.0
    %518 = vmatpush1.msra.mxu0 0.0
    %519 = vmatprep.subr.mxu0 0.0
    %520 = vmatpush1.msra.mxu0 0.0
    %521 = vmatprep.subr.mxu0 0.0
    %522 = vmatpush1.msra.mxu0 0.0
    %523 = vmatprep.subr.mxu0 0.0
    %524 = vmatpush1.msra.mxu0 0.0
    %525 = vmatprep.subr.mxu0 0.0
    %526 = vmatpush1.msra.mxu0 0.0
    %527 = vmatprep.subr.mxu0 0.0
    %528 = vmatpush1.msra.mxu0 0.0
    %529 = vmatprep.subr.mxu0 0.0
    %530 = vmatpush1.msra.mxu0 0.0
    %531 = vmatprep.subr.mxu0 0.0
    %532 = vmatpush1.msra.mxu0 0.0
    %533 = vmatprep.mubr.f32.mxu0 0.0
    %534 = vmatmul.mubr.f32.gmra.mrb[0].mxu0 %v458
    %v535 = vpop.f32.mrb[0].mxu0
    %v536 = vadd.f32 0.0, %v535
    %v537 = vpop.f32.mrb[0].mxu0
    %538 = vmatprep.mubr.f32.mxu0 0.0
    %539 = vmatmul.mubr.f32.gmra.mrb[0].mxu0 %v461
    %v540 = vpop.f32.mrb[0].mxu0
    %v541 = vadd.f32 0.0, %v540
    %v542 = vpop.f32.mrb[0].mxu0
    %543 = vmatprep.mubr.f32.mxu0 0.0
    %544 = vmatmul.mubr.f32.gmra.mrb[0].mxu0 %v464
    %v545 = vpop.f32.mrb[0].mxu0
    %v546 = vadd.f32 0.0, %v545
    %v547 = vpop.f32.mrb[0].mxu0
    %548 = vmatprep.mubr.f32.mxu0 0.0
    %549 = vmatmul.mubr.f32.gmra.mrb[0].mxu0 %v467
    %v550 = vpop.f32.mrb[0].mxu0
    %v551 = vadd.f32 0.0, %v550
    %v552 = vpop.f32.mrb[0].mxu0
    %553 = vdwg.mxu0
    %v554 = vadd.f32 %v426, %v536
    %v555 = vadd.f32 %v431, %v541
    %v556 = vadd.f32 %v436, %v546
    %v557 = vadd.f32 %v441, %v551
    %v558 = vld [vmem:[%s2] sm:$0x1]
    %v560 = vlaneseq
    %v561 = vshrl.u32 %v560, 7
    %v562 = vsub.s32 0, %v561
    %v563 = vrot.slane %v558, %v562
    %v565 = vadd.f32 %v554, %v563
    %v566 = vadd.f32 %v555, %v563
    %v567 = vadd.f32 %v556, %v563
    %v568 = vadd.f32 %v557, %v563
    %v569 = vsel %vm209, %v565, 0.0
    %v570 = vsel %vm209, %v566, 0.0
    %v571 = vadd.f32 %v569, %v570
    %v572 = vsel %vm209, %v567, 0.0
    %v573 = vadd.f32 %v571, %v572
    %v574 = vsel %vm209, %v568, 0.0
    %v575 = vadd.f32 %v573, %v574
    %v576 = vrot.slane %v575, 4
    %v577 = vadd.f32 %v575, %v576
    %v578 = vrot.slane %v577, 2
    %v579 = vadd.f32 %v577, %v578
    %v580 = vrot.slane %v579, 1
    %v581 = vadd.f32 %v579, %v580
    %v582 = vmul.f32 %v565, %v565
    %v583 = vmul.f32 %v566, %v566
    %v584 = vmul.f32 %v567, %v567
    %v585 = vmul.f32 %v568, %v568
    %v586 = vsel %vm209, %v582, 0.0
    %v587 = vsel %vm209, %v583, 0.0
    %v588 = vadd.f32 %v586, %v587
    %v589 = vsel %vm209, %v584, 0.0
    %v590 = vadd.f32 %v588, %v589
    %v591 = vsel %vm209, %v585, 0.0
    %v592 = vadd.f32 %v590, %v591
    %v593 = vrot.slane %v592, 4
    %v594 = vadd.f32 %v592, %v593
    %v595 = vrot.slane %v594, 2
    %v596 = vadd.f32 %v594, %v595
    %v597 = vrot.slane %v596, 1
    %v598 = vadd.f32 %v596, %v597
    %vm599 = vcmask 1040384
    %v600 = vsel %vm599, %v581, %v598
    %v602 = vsel %vm209, %v600, 0
    %604 = vmatprep.subr.mxu0 0.0
    %605 = vmatpush1.msra.mxu0 %v201
    %606 = vmatprep.subr.mxu0 0.0
    %607 = vmatpush1.msra.mxu0 %v202
    %608 = vmatprep.subr.mxu0 0.0
    %609 = vmatpush1.msra.mxu0 %v203
    %610 = vmatprep.subr.mxu0 0.0
    %611 = vmatpush1.msra.mxu0 %v204
    %612 = vmatprep.subr.mxu0 0.0
    %613 = vmatpush1.msra.mxu0 %v205
    %614 = vmatprep.subr.mxu0 0.0
    %615 = vmatpush1.msra.mxu0 %v206
    %616 = vmatprep.subr.mxu0 0.0
    %617 = vmatpush1.msra.mxu0 %v207
    %618 = vmatprep.subr.mxu0 0.0
    %619 = vmatpush1.msra.mxu0 %v208
    %620 = vmatprep.subr.mxu0 0.0
    %621 = vmatpush1.msra.mxu0 0.0
    %622 = vmatprep.subr.mxu0 0.0
    %623 = vmatpush1.msra.mxu0 0.0
    %624 = vmatprep.subr.mxu0 0.0
    %625 = vmatpush1.msra.mxu0 0.0
    %626 = vmatprep.subr.mxu0 0.0
    %627 = vmatpush1.msra.mxu0 0.0
    %628 = vmatprep.subr.mxu0 0.0
    %629 = vmatpush1.msra.mxu0 0.0
    %630 = vmatprep.subr.mxu0 0.0
    %631 = vmatpush1.msra.mxu0 0.0
    %632 = vmatprep.subr.mxu0 0.0
    %633 = vmatpush1.msra.mxu0 0.0
    %634 = vmatprep.subr.mxu0 0.0
    %635 = vmatpush1.msra.mxu0 0.0
    %636 = vmatprep.subr.mxu0 0.0
    %637 = vmatpush1.msra.mxu0 0.0
    %638 = vmatprep.subr.mxu0 0.0
    %639 = vmatpush1.msra.mxu0 0.0
    %640 = vmatprep.subr.mxu0 0.0
    %641 = vmatpush1.msra.mxu0 0.0
    %642 = vmatprep.subr.mxu0 0.0
    %643 = vmatpush1.msra.mxu0 0.0
    %644 = vmatprep.subr.mxu0 0.0
    %645 = vmatpush1.msra.mxu0 0.0
    %646 = vmatprep.subr.mxu0 0.0
    %647 = vmatpush1.msra.mxu0 0.0
    %648 = vmatprep.subr.mxu0 0.0
    %649 = vmatpush1.msra.mxu0 0.0
    %650 = vmatprep.subr.mxu0 0.0
    %651 = vmatpush1.msra.mxu0 0.0
    %652 = vmatprep.subr.mxu0 0.0
    %653 = vmatpush1.msra.mxu0 0.0
    %654 = vmatprep.subr.mxu0 0.0
    %655 = vmatpush1.msra.mxu0 0.0
    %656 = vmatprep.subr.mxu0 0.0
    %657 = vmatpush1.msra.mxu0 0.0
    %658 = vmatprep.subr.mxu0 0.0
    %659 = vmatpush1.msra.mxu0 0.0
    %660 = vmatprep.subr.mxu0 0.0
    %661 = vmatpush1.msra.mxu0 0.0
    %662 = vmatprep.subr.mxu0 0.0
    %663 = vmatpush1.msra.mxu0 0.0
    %664 = vmatprep.subr.mxu0 0.0
    %665 = vmatpush1.msra.mxu0 0.0
    %666 = vmatprep.subr.mxu0 0.0
    %667 = vmatpush1.msra.mxu0 0.0
    %668 = vmatprep.mubr.f32.mxu0 0.0
    %669 = vmatmul.mubr.f32.gmra.mrb[0].mxu0 %v602
    %v670 = vpop.f32.mrb[0].mxu0
    %v671 = vadd.f32 0.0, %v670
    %v672 = vpop.f32.mrb[0].mxu0
    %673 = vdwg.mxu0
    %v674 = vmul.f32 %v671, 0.001953125
    %v675 = vmul.f32 %v674, %v674
    %v677 = vrot.slane %v675, 7
    %v679 = vsub.f32 %v674, %v677
    %v680 = vmax.f32 %v679, 0.0
    %v681 = vadd.f32 %v680, 1e-05
    %v682 = vrsqrt.pop %v681
    %v683 = vld [vmem:[%s3] sm:$0x1]
    %v685 = vlaneseq
    %v686 = vshrl.u32 %v685, 7
    %v687 = vsub.s32 0, %v686
    %v688 = vrot.slane %v683, %v687
    %v690 = vmul.f32 %v682, %v688
    %v691 = vlaneseq
    %v692 = vshrl.u32 %v691, 7
    %v693 = vsub.s32 0, %v692
    %v694 = vrot.slane %v674, %v693
    %v695 = vsub.f32 %v565, %v694
    %v696 = vsub.f32 %v566, %v694
    %v697 = vsub.f32 %v567, %v694
    %v698 = vsub.f32 %v568, %v694
    %v699 = vlaneseq
    %v700 = vshrl.u32 %v699, 7
    %v701 = vsub.s32 1, %v700
    %v702 = vrot.slane %v690, %v701
    %v703 = vmul.f32 %v695, %v702
    %v704 = vmul.f32 %v696, %v702
    %v705 = vmul.f32 %v697, %v702
    %v706 = vmul.f32 %v698, %v702
    %v707 = vld [vmem:[%s4] sm:$0x1]
    %v709 = vlaneseq
    %v710 = vshrl.u32 %v709, 7
    %v711 = vsub.s32 0, %v710
    %v712 = vrot.slane %v707, %v711
    %v714 = vadd.f32 %v703, %v712
    %v715 = vadd.f32 %v704, %v712
    %v716 = vadd.f32 %v705, %v712
    %v717 = vadd.f32 %v706, %v712
    %v718 = vmax.f32 %v714, 0.0
    %v719 = vmax.f32 %v715, 0.0
    %v720 = vmax.f32 %v716, 0.0
    %v721 = vmax.f32 %v717, 0.0
    %722 = vst.msk [vmem:[#allocation2 + $0x1] sm:$0xff] %vm209, %v718
    %723 = vst.msk [vmem:[#allocation2 + $0x9] sm:$0xff] %vm209, %v719
    %724 = vst.msk [vmem:[#allocation2 + $0x19] sm:$0xff] %vm209, %v720
    %725 = vst.msk [vmem:[#allocation2 + $0x21] sm:$0xff] %vm209, %v721
    %v726 = vld [vmem:[#allocation2] sm:$0xff]
    %v727 = vld [vmem:[#allocation2 + $0x8] sm:$0xff]
    %v728 = vld [vmem:[#allocation2 + $0x18] sm:$0xff]
    %v729 = vld [vmem:[#allocation2 + $0x20] sm:$0xff]
    %v730 = vld [vmem:[#allocation8] sm:$0xff]
    %v731 = vld [vmem:[#allocation8 + $0x8] sm:$0xff]
    %v732 = vld [vmem:[#allocation8 + $0x10] sm:$0xff]
    %v733 = vld [vmem:[#allocation8 + $0x18] sm:$0xff]
    %v734 = vld [vmem:[#allocation8 + $0x20] sm:$0xff]
    %v735 = vld [vmem:[#allocation8 + $0x28] sm:$0xff]
    %v736 = vld [vmem:[#allocation8 + $0x30] sm:$0xff]
    %v737 = vld [vmem:[#allocation8 + $0x38] sm:$0xff]
    %v738 = vld [vmem:[#allocation2 + $0x1] sm:$0xff]
    %v739 = vld [vmem:[#allocation2 + $0x9] sm:$0xff]
    %v740 = vld [vmem:[#allocation2 + $0x19] sm:$0xff]
    %v741 = vld [vmem:[#allocation2 + $0x21] sm:$0xff]
    %s742 = scalar_lea.vmem [#allocation8], 64
    %v743 = vld [vmem:[%s742] sm:$0xff]
    %v744 = vld [vmem:[%s742 + $0x8] sm:$0xff]
    %v745 = vld [vmem:[%s742 + $0x10] sm:$0xff]
    %v746 = vld [vmem:[%s742 + $0x18] sm:$0xff]
    %v747 = vld [vmem:[%s742 + $0x20] sm:$0xff]
    %v748 = vld [vmem:[%s742 + $0x28] sm:$0xff]
    %v749 = vld [vmem:[%s742 + $0x30] sm:$0xff]
    %v750 = vld [vmem:[%s742 + $0x38] sm:$0xff]
    %v752 = vsel %vm209, %v738, 0
    %v755 = vsel %vm209, %v739, 0
    %v758 = vsel %vm209, %v740, 0
    %v761 = vsel %vm209, %v741, 0
    %763 = vmatprep.subr.mxu0 0.0
    %764 = vmatpush1.msra.mxu0 %v743
    %765 = vmatprep.subr.mxu0 0.0
    %766 = vmatpush1.msra.mxu0 %v744
    %767 = vmatprep.subr.mxu0 0.0
    %768 = vmatpush1.msra.mxu0 %v745
    %769 = vmatprep.subr.mxu0 0.0
    %770 = vmatpush1.msra.mxu0 %v746
    %771 = vmatprep.subr.mxu0 0.0
    %772 = vmatpush1.msra.mxu0 %v747
    %773 = vmatprep.subr.mxu0 0.0
    %774 = vmatpush1.msra.mxu0 %v748
    %775 = vmatprep.subr.mxu0 0.0
    %776 = vmatpush1.msra.mxu0 %v749
    %777 = vmatprep.subr.mxu0 0.0
    %778 = vmatpush1.msra.mxu0 %v750
    %779 = vmatprep.subr.mxu0 0.0
    %780 = vmatpush1.msra.mxu0 0.0
    %781 = vmatprep.subr.mxu0 0.0
    %782 = vmatpush1.msra.mxu0 0.0
    %783 = vmatprep.subr.mxu0 0.0
    %784 = vmatpush1.msra.mxu0 0.0
    %785 = vmatprep.subr.mxu0 0.0
    %786 = vmatpush1.msra.mxu0 0.0
    %787 = vmatprep.subr.mxu0 0.0
    %788 = vmatpush1.msra.mxu0 0.0
    %789 = vmatprep.subr.mxu0 0.0
    %790 = vmatpush1.msra.mxu0 0.0
    %791 = vmatprep.subr.mxu0 0.0
    %792 = vmatpush1.msra.mxu0 0.0
    %793 = vmatprep.subr.mxu0 0.0
    %794 = vmatpush1.msra.mxu0 0.0
    %795 = vmatprep.subr.mxu0 0.0
    %796 = vmatpush1.msra.mxu0 0.0
    %797 = vmatprep.subr.mxu0 0.0
    %798 = vmatpush1.msra.mxu0 0.0
    %799 = vmatprep.subr.mxu0 0.0
    %800 = vmatpush1.msra.mxu0 0.0
    %801 = vmatprep.subr.mxu0 0.0
    %802 = vmatpush1.msra.mxu0 0.0
    %803 = vmatprep.subr.mxu0 0.0
    %804 = vmatpush1.msra.mxu0 0.0
    %805 = vmatprep.subr.mxu0 0.0
    %806 = vmatpush1.msra.mxu0 0.0
    %807 = vmatprep.subr.mxu0 0.0
    %808 = vmatpush1.msra.mxu0 0.0
    %809 = vmatprep.subr.mxu0 0.0
    %810 = vmatpush1.msra.mxu0 0.0
    %811 = vmatprep.subr.mxu0 0.0
    %812 = vmatpush1.msra.mxu0 0.0
    %813 = vmatprep.subr.mxu0 0.0
    %814 = vmatpush1.msra.mxu0 0.0
    %815 = vmatprep.subr.mxu0 0.0
    %816 = vmatpush1.msra.mxu0 0.0
    %817 = vmatprep.subr.mxu0 0.0
    %818 = vmatpush1.msra.mxu0 0.0
    %819 = vmatprep.subr.mxu0 0.0
    %820 = vmatpush1.msra.mxu0 0.0
    %821 = vmatprep.subr.mxu0 0.0
    %822 = vmatpush1.msra.mxu0 0.0
    %823 = vmatprep.subr.mxu0 0.0
    %824 = vmatpush1.msra.mxu0 0.0
    %825 = vmatprep.subr.mxu0 0.0
    %826 = vmatpush1.msra.mxu0 0.0
    %827 = vmatprep.mubr.f32.mxu0 0.0
    %828 = vmatmul.mubr.f32.gmra.mrb[0].mxu0 %v752
    %v829 = vpop.f32.mrb[0].mxu0
    %v830 = vadd.f32 0.0, %v829
    %v831 = vpop.f32.mrb[0].mxu0
    %832 = vmatprep.mubr.f32.mxu0 0.0
    %833 = vmatmul.mubr.f32.gmra.mrb[0].mxu0 %v755
    %v834 = vpop.f32.mrb[0].mxu0
    %v835 = vadd.f32 0.0, %v834
    %v836 = vpop.f32.mrb[0].mxu0
    %837 = vmatprep.mubr.f32.mxu0 0.0
    %838 = vmatmul.mubr.f32.gmra.mrb[0].mxu0 %v758
    %v839 = vpop.f32.mrb[0].mxu0
    %v840 = vadd.f32 0.0, %v839
    %v841 = vpop.f32.mrb[0].mxu0
    %842 = vmatprep.mubr.f32.mxu0 0.0
    %843 = vmatmul.mubr.f32.gmra.mrb[0].mxu0 %v761
    %v844 = vpop.f32.mrb[0].mxu0
    %v845 = vadd.f32 0.0, %v844
    %v846 = vpop.f32.mrb[0].mxu0
    %847 = vdwg.mxu0
    %v849 = vsel %vm209, %v726, 0
    %v852 = vsel %vm209, %v727, 0
    %v855 = vsel %vm209, %v728, 0
    %v858 = vsel %vm209, %v729, 0
    %860 = vmatprep.subr.mxu0 0.0
    %861 = vmatpush1.msra.mxu0 %v730
    %862 = vmatprep.subr.mxu0 0.0
    %863 = vmatpush1.msra.mxu0 %v731
    %864 = vmatprep.subr.mxu0 0.0
    %865 = vmatpush1.msra.mxu0 %v732
    %866 = vmatprep.subr.mxu0 0.0
    %867 = vmatpush1.msra.mxu0 %v733
    %868 = vmatprep.subr.mxu0 0.0
    %869 = vmatpush1.msra.mxu0 %v734
    %870 = vmatprep.subr.mxu0 0.0
    %871 = vmatpush1.msra.mxu0 %v735
    %872 = vmatprep.subr.mxu0 0.0
    %873 = vmatpush1.msra.mxu0 %v736
    %874 = vmatprep.subr.mxu0 0.0
    %875 = vmatpush1.msra.mxu0 %v737
    %876 = vmatprep.subr.mxu0 0.0
    %877 = vmatpush1.msra.mxu0 0.0
    %878 = vmatprep.subr.mxu0 0.0
    %879 = vmatpush1.msra.mxu0 0.0
    %880 = vmatprep.subr.mxu0 0.0
    %881 = vmatpush1.msra.mxu0 0.0
    %882 = vmatprep.subr.mxu0 0.0
    %883 = vmatpush1.msra.mxu0 0.0
    %884 = vmatprep.subr.mxu0 0.0
    %885 = vmatpush1.msra.mxu0 0.0
    %886 = vmatprep.subr.mxu0 0.0
    %887 = vmatpush1.msra.mxu0 0.0
    %888 = vmatprep.subr.mxu0 0.0
    %889 = vmatpush1.msra.mxu0 0.0
    %890 = vmatprep.subr.mxu0 0.0
    %891 = vmatpush1.msra.mxu0 0.0
    %892 = vmatprep.subr.mxu0 0.0
    %893 = vmatpush1.msra.mxu0 0.0
    %894 = vmatprep.subr.mxu0 0.0
    %895 = vmatpush1.msra.mxu0 0.0
    %896 = vmatprep.subr.mxu0 0.0
    %897 = vmatpush1.msra.mxu0 0.0
    %898 = vmatprep.subr.mxu0 0.0
    %899 = vmatpush1.msra.mxu0 0.0
    %900 = vmatprep.subr.mxu0 0.0
    %901 = vmatpush1.msra.mxu0 0.0
    %902 = vmatprep.subr.mxu0 0.0
    %903 = vmatpush1.msra.mxu0 0.0
    %904 = vmatprep.subr.mxu0 0.0
    %905 = vmatpush1.msra.mxu0 0.0
    %906 = vmatprep.subr.mxu0 0.0
    %907 = vmatpush1.msra.mxu0 0.0
    %908 = vmatprep.subr.mxu0 0.0
    %909 = vmatpush1.msra.mxu0 0.0
    %910 = vmatprep.subr.mxu0 0.0
    %911 = vmatpush1.msra.mxu0 0.0
    %912 = vmatprep.subr.mxu0 0.0
    %913 = vmatpush1.msra.mxu0 0.0
    %914 = vmatprep.subr.mxu0 0.0
    %915 = vmatpush1.msra.mxu0 0.0
    %916 = vmatprep.subr.mxu0 0.0
    %917 = vmatpush1.msra.mxu0 0.0
    %918 = vmatprep.subr.mxu0 0.0
    %919 = vmatpush1.msra.mxu0 0.0
    %920 = vmatprep.subr.mxu0 0.0
    %921 = vmatpush1.msra.mxu0 0.0
    %922 = vmatprep.subr.mxu0 0.0
    %923 = vmatpush1.msra.mxu0 0.0
    %924 = vmatprep.mubr.f32.mxu0 0.0
    %925 = vmatmul.mubr.f32.gmra.mrb[0].mxu0 %v849
    %v926 = vpop.f32.mrb[0].mxu0
    %v927 = vadd.f32 %v830, %v926
    %v928 = vpop.f32.mrb[0].mxu0
    %929 = vmatprep.mubr.f32.mxu0 0.0
    %930 = vmatmul.mubr.f32.gmra.mrb[0].mxu0 %v852
    %v931 = vpop.f32.mrb[0].mxu0
    %v932 = vadd.f32 %v835, %v931
    %v933 = vpop.f32.mrb[0].mxu0
    %934 = vmatprep.mubr.f32.mxu0 0.0
    %935 = vmatmul.mubr.f32.gmra.mrb[0].mxu0 %v855
    %v936 = vpop.f32.mrb[0].mxu0
    %v937 = vadd.f32 %v840, %v936
    %v938 = vpop.f32.mrb[0].mxu0
    %939 = vmatprep.mubr.f32.mxu0 0.0
    %940 = vmatmul.mubr.f32.gmra.mrb[0].mxu0 %v858
    %v941 = vpop.f32.mrb[0].mxu0
    %v942 = vadd.f32 %v845, %v941
    %v943 = vpop.f32.mrb[0].mxu0
    %944 = vdwg.mxu0
    %v945 = vld [vmem:[#allocation2 + $0x2] sm:$0xff]
    %v946 = vld [vmem:[#allocation2 + $0xa] sm:$0xff]
    %v947 = vld [vmem:[#allocation2 + $0x1a] sm:$0xff]
    %v948 = vld [vmem:[#allocation2 + $0x22] sm:$0xff]
    %s949 = scalar_lea.vmem [#allocation8], 128
    %v950 = vld [vmem:[%s949] sm:$0xff]
    %v951 = vld [vmem:[%s949 + $0x8] sm:$0xff]
    %v952 = vld [vmem:[%s949 + $0x10] sm:$0xff]
    %v953 = vld [vmem:[%s949 + $0x18] sm:$0xff]
    %v954 = vld [vmem:[%s949 + $0x20] sm:$0xff]
    %v955 = vld [vmem:[%s949 + $0x28] sm:$0xff]
    %v956 = vld [vmem:[%s949 + $0x30] sm:$0xff]
    %v957 = vld [vmem:[%s949 + $0x38] sm:$0xff]
    %v959 = vsel %vm209, %v945, 0
    %v962 = vsel %vm209, %v946, 0
    %v965 = vsel %vm209, %v947, 0
    %v968 = vsel %vm209, %v948, 0
    %970 = vmatprep.subr.mxu0 0.0
    %971 = vmatpush1.msra.mxu0 %v950
    %972 = vmatprep.subr.mxu0 0.0
    %973 = vmatpush1.msra.mxu0 %v951
    %974 = vmatprep.subr.mxu0 0.0
    %975 = vmatpush1.msra.mxu0 %v952
    %976 = vmatprep.subr.mxu0 0.0
    %977 = vmatpush1.msra.mxu0 %v953
    %978 = vmatprep.subr.mxu0 0.0
    %979 = vmatpush1.msra.mxu0 %v954
    %980 = vmatprep.subr.mxu0 0.0
    %981 = vmatpush1.msra.mxu0 %v955
    %982 = vmatprep.subr.mxu0 0.0
    %983 = vmatpush1.msra.mxu0 %v956
    %984 = vmatprep.subr.mxu0 0.0
    %985 = vmatpush1.msra.mxu0 %v957
    %986 = vmatprep.subr.mxu0 0.0
    %987 = vmatpush1.msra.mxu0 0.0
    %988 = vmatprep.subr.mxu0 0.0
    %989 = vmatpush1.msra.mxu0 0.0
    %990 = vmatprep.subr.mxu0 0.0
    %991 = vmatpush1.msra.mxu0 0.0
    %992 = vmatprep.subr.mxu0 0.0
    %993 = vmatpush1.msra.mxu0 0.0
    %994 = vmatprep.subr.mxu0 0.0
    %995 = vmatpush1.msra.mxu0 0.0
    %996 = vmatprep.subr.mxu0 0.0
    %997 = vmatpush1.msra.mxu0 0.0
    %998 = vmatprep.subr.mxu0 0.0
    %999 = vmatpush1.msra.mxu0 0.0
    %1000 = vmatprep.subr.mxu0 0.0
    %1001 = vmatpush1.msra.mxu0 0.0
    %1002 = vmatprep.subr.mxu0 0.0
    %1003 = vmatpush1.msra.mxu0 0.0
    %1004 = vmatprep.subr.mxu0 0.0
    %1005 = vmatpush1.msra.mxu0 0.0
    %1006 = vmatprep.subr.mxu0 0.0
    %1007 = vmatpush1.msra.mxu0 0.0
    %1008 = vmatprep.subr.mxu0 0.0
    %1009 = vmatpush1.msra.mxu0 0.0
    %1010 = vmatprep.subr.mxu0 0.0
    %1011 = vmatpush1.msra.mxu0 0.0
    %1012 = vmatprep.subr.mxu0 0.0
    %1013 = vmatpush1.msra.mxu0 0.0
    %1014 = vmatprep.subr.mxu0 0.0
    %1015 = vmatpush1.msra.mxu0 0.0
    %1016 = vmatprep.subr.mxu0 0.0
    %1017 = vmatpush1.msra.mxu0 0.0
    %1018 = vmatprep.subr.mxu0 0.0
    %1019 = vmatpush1.msra.mxu0 0.0
    %1020 = vmatprep.subr.mxu0 0.0
    %1021 = vmatpush1.msra.mxu0 0.0
    %1022 = vmatprep.subr.mxu0 0.0
    %1023 = vmatpush1.msra.mxu0 0.0
    %1024 = vmatprep.subr.mxu0 0.0
    %1025 = vmatpush1.msra.mxu0 0.0
    %1026 = vmatprep.subr.mxu0 0.0
    %1027 = vmatpush1.msra.mxu0 0.0
    %1028 = vmatprep.subr.mxu0 0.0
    %1029 = vmatpush1.msra.mxu0 0.0
    %1030 = vmatprep.subr.mxu0 0.0
    %1031 = vmatpush1.msra.mxu0 0.0
    %1032 = vmatprep.subr.mxu0 0.0
    %1033 = vmatpush1.msra.mxu0 0.0
    %1034 = vmatprep.mubr.f32.mxu0 0.0
    %1035 = vmatmul.mubr.f32.gmra.mrb[0].mxu0 %v959
    %v1036 = vpop.f32.mrb[0].mxu0
    %v1037 = vadd.f32 0.0, %v1036
    %v1038 = vpop.f32.mrb[0].mxu0
    %1039 = vmatprep.mubr.f32.mxu0 0.0
    %1040 = vmatmul.mubr.f32.gmra.mrb[0].mxu0 %v962
    %v1041 = vpop.f32.mrb[0].mxu0
    %v1042 = vadd.f32 0.0, %v1041
    %v1043 = vpop.f32.mrb[0].mxu0
    %1044 = vmatprep.mubr.f32.mxu0 0.0
    %1045 = vmatmul.mubr.f32.gmra.mrb[0].mxu0 %v965
    %v1046 = vpop.f32.mrb[0].mxu0
    %v1047 = vadd.f32 0.0, %v1046
    %v1048 = vpop.f32.mrb[0].mxu0
    %1049 = vmatprep.mubr.f32.mxu0 0.0
    %1050 = vmatmul.mubr.f32.gmra.mrb[0].mxu0 %v968
    %v1051 = vpop.f32.mrb[0].mxu0
    %v1052 = vadd.f32 0.0, %v1051
    %v1053 = vpop.f32.mrb[0].mxu0
    %1054 = vdwg.mxu0
    %v1055 = vadd.f32 %v927, %v1037
    %v1056 = vadd.f32 %v932, %v1042
    %v1057 = vadd.f32 %v937, %v1047
    %v1058 = vadd.f32 %v942, %v1052
    %v1059 = vld [vmem:[%s6] sm:$0x1]
    %v1061 = vlaneseq
    %v1062 = vshrl.u32 %v1061, 7
    %v1063 = vsub.s32 0, %v1062
    %v1064 = vrot.slane %v1059, %v1063
    %v1066 = vadd.f32 %v1055, %v1064
    %v1067 = vadd.f32 %v1056, %v1064
    %v1068 = vadd.f32 %v1057, %v1064
    %v1069 = vadd.f32 %v1058, %v1064
    %v1070 = vsel %vm209, %v1066, 0.0
    %v1071 = vsel %vm209, %v1067, 0.0
    %v1072 = vadd.f32 %v1070, %v1071
    %v1073 = vsel %vm209, %v1068, 0.0
    %v1074 = vadd.f32 %v1072, %v1073
    %v1075 = vsel %vm209, %v1069, 0.0
    %v1076 = vadd.f32 %v1074, %v1075
    %v1077 = vrot.slane %v1076, 4
    %v1078 = vadd.f32 %v1076, %v1077
    %v1079 = vrot.slane %v1078, 2
    %v1080 = vadd.f32 %v1078, %v1079
    %v1081 = vrot.slane %v1080, 1
    %v1082 = vadd.f32 %v1080, %v1081
    %v1083 = vmul.f32 %v1066, %v1066
    %v1084 = vmul.f32 %v1067, %v1067
    %v1085 = vmul.f32 %v1068, %v1068
    %v1086 = vmul.f32 %v1069, %v1069
    %v1087 = vsel %vm209, %v1083, 0.0
    %v1088 = vsel %vm209, %v1084, 0.0
    %v1089 = vadd.f32 %v1087, %v1088
    %v1090 = vsel %vm209, %v1085, 0.0
    %v1091 = vadd.f32 %v1089, %v1090
    %v1092 = vsel %vm209, %v1086, 0.0
    %v1093 = vadd.f32 %v1091, %v1092
    %v1094 = vrot.slane %v1093, 4
    %v1095 = vadd.f32 %v1093, %v1094
    %v1096 = vrot.slane %v1095, 2
    %v1097 = vadd.f32 %v1095, %v1096
    %v1098 = vrot.slane %v1097, 1
    %v1099 = vadd.f32 %v1097, %v1098
    %v1100 = vsel %vm599, %v1082, %v1099
    %v1102 = vsel %vm209, %v1100, 0
    %1104 = vmatprep.subr.mxu0 0.0
    %1105 = vmatpush1.msra.mxu0 %v201
    %1106 = vmatprep.subr.mxu0 0.0
    %1107 = vmatpush1.msra.mxu0 %v202
    %1108 = vmatprep.subr.mxu0 0.0
    %1109 = vmatpush1.msra.mxu0 %v203
    %1110 = vmatprep.subr.mxu0 0.0
    %1111 = vmatpush1.msra.mxu0 %v204
    %1112 = vmatprep.subr.mxu0 0.0
    %1113 = vmatpush1.msra.mxu0 %v205
    %1114 = vmatprep.subr.mxu0 0.0
    %1115 = vmatpush1.msra.mxu0 %v206
    %1116 = vmatprep.subr.mxu0 0.0
    %1117 = vmatpush1.msra.mxu0 %v207
    %1118 = vmatprep.subr.mxu0 0.0
    %1119 = vmatpush1.msra.mxu0 %v208
    %1120 = vmatprep.subr.mxu0 0.0
    %1121 = vmatpush1.msra.mxu0 0.0
    %1122 = vmatprep.subr.mxu0 0.0
    %1123 = vmatpush1.msra.mxu0 0.0
    %1124 = vmatprep.subr.mxu0 0.0
    %1125 = vmatpush1.msra.mxu0 0.0
    %1126 = vmatprep.subr.mxu0 0.0
    %1127 = vmatpush1.msra.mxu0 0.0
    %1128 = vmatprep.subr.mxu0 0.0
    %1129 = vmatpush1.msra.mxu0 0.0
    %1130 = vmatprep.subr.mxu0 0.0
    %1131 = vmatpush1.msra.mxu0 0.0
    %1132 = vmatprep.subr.mxu0 0.0
    %1133 = vmatpush1.msra.mxu0 0.0
    %1134 = vmatprep.subr.mxu0 0.0
    %1135 = vmatpush1.msra.mxu0 0.0
    %1136 = vmatprep.subr.mxu0 0.0
    %1137 = vmatpush1.msra.mxu0 0.0
    %1138 = vmatprep.subr.mxu0 0.0
    %1139 = vmatpush1.msra.mxu0 0.0
    %1140 = vmatprep.subr.mxu0 0.0
    %1141 = vmatpush1.msra.mxu0 0.0
    %1142 = vmatprep.subr.mxu0 0.0
    %1143 = vmatpush1.msra.mxu0 0.0
    %1144 = vmatprep.subr.mxu0 0.0
    %1145 = vmatpush1.msra.mxu0 0.0
    %1146 = vmatprep.subr.mxu0 0.0
    %1147 = vmatpush1.msra.mxu0 0.0
    %1148 = vmatprep.subr.mxu0 0.0
    %1149 = vmatpush1.msra.mxu0 0.0
    %1150 = vmatprep.subr.mxu0 0.0
    %1151 = vmatpush1.msra.mxu0 0.0
    %1152 = vmatprep.subr.mxu0 0.0
    %1153 = vmatpush1.msra.mxu0 0.0
    %1154 = vmatprep.subr.mxu0 0.0
    %1155 = vmatpush1.msra.mxu0 0.0
    %1156 = vmatprep.subr.mxu0 0.0
    %1157 = vmatpush1.msra.mxu0 0.0
    %1158 = vmatprep.subr.mxu0 0.0
    %1159 = vmatpush1.msra.mxu0 0.0
    %1160 = vmatprep.subr.mxu0 0.0
    %1161 = vmatpush1.msra.mxu0 0.0
    %1162 = vmatprep.subr.mxu0 0.0
    %1163 = vmatpush1.msra.mxu0 0.0
    %1164 = vmatprep.subr.mxu0 0.0
    %1165 = vmatpush1.msra.mxu0 0.0
    %1166 = vmatprep.subr.mxu0 0.0
    %1167 = vmatpush1.msra.mxu0 0.0
    %1168 = vmatprep.mubr.f32.mxu0 0.0
    %1169 = vmatmul.mubr.f32.gmra.mrb[0].mxu0 %v1102
    %v1170 = vpop.f32.mrb[0].mxu0
    %v1171 = vadd.f32 0.0, %v1170
    %v1172 = vpop.f32.mrb[0].mxu0
    %1173 = vdwg.mxu0
    %v1174 = vmul.f32 %v1171, 0.001953125
    %v1175 = vmul.f32 %v1174, %v1174
    %v1177 = vrot.slane %v1175, 7
    %v1179 = vsub.f32 %v1174, %v1177
    %v1180 = vmax.f32 %v1179, 0.0
    %v1181 = vadd.f32 %v1180, 1e-05
    %v1182 = vrsqrt.pop %v1181
    %v1183 = vld [vmem:[%s7] sm:$0x1]
    %v1185 = vlaneseq
    %v1186 = vshrl.u32 %v1185, 7
    %v1187 = vsub.s32 0, %v1186
    %v1188 = vrot.slane %v1183, %v1187
    %v1190 = vmul.f32 %v1182, %v1188
    %v1191 = vlaneseq
    %v1192 = vshrl.u32 %v1191, 7
    %v1193 = vsub.s32 0, %v1192
    %v1194 = vrot.slane %v1174, %v1193
    %v1195 = vsub.f32 %v1066, %v1194
    %v1196 = vsub.f32 %v1067, %v1194
    %v1197 = vsub.f32 %v1068, %v1194
    %v1198 = vsub.f32 %v1069, %v1194
    %v1199 = vlaneseq
    %v1200 = vshrl.u32 %v1199, 7
    %v1201 = vsub.s32 1, %v1200
    %v1202 = vrot.slane %v1190, %v1201
    %v1203 = vmul.f32 %v1195, %v1202
    %v1204 = vmul.f32 %v1196, %v1202
    %v1205 = vmul.f32 %v1197, %v1202
    %v1206 = vmul.f32 %v1198, %v1202
    %v1207 = vld [vmem:[%s8] sm:$0x1]
    %v1209 = vlaneseq
    %v1210 = vshrl.u32 %v1209, 7
    %v1211 = vsub.s32 0, %v1210
    %v1212 = vrot.slane %v1207, %v1211
    %v1214 = vadd.f32 %v1203, %v1212
    %v1215 = vadd.f32 %v1204, %v1212
    %v1216 = vadd.f32 %v1205, %v1212
    %v1217 = vadd.f32 %v1206, %v1212
    %v1218 = vld [vmem:[#allocation3] sm:$0xff]
    %v1219 = vld [vmem:[#allocation3 + $0x8] sm:$0xff]
    %v1220 = vld [vmem:[#allocation3 + $0x10] sm:$0xff]
    %v1221 = vld [vmem:[#allocation3 + $0x18] sm:$0xff]
    %v1222 = vadd.f32 %v1218, %v1214
    %v1223 = vadd.f32 %v1219, %v1215
    %v1224 = vadd.f32 %v1220, %v1216
    %v1225 = vadd.f32 %v1221, %v1217
    %v1230 = vcombine.high %v1222, %v1222
    %v1232 = vunpack.c.l.s4 1983009808
    %v1233 = vunpack.c.0.s8 %v1232
    %v1234 = vlaneseq
    %v1235 = vshrl.u32 %v1234, 7
    %v1236 = vsub.s32 %v1233, %v1235
    %v1237 = vrot.slane %v1222, %v1236
    %v1239 = vunpack.c.l.s4 1983009808
    %v1240 = vunpack.c.0.s8 %v1239
    %v1241 = vlaneseq
    %v1242 = vshrl.u32 %v1241, 7
    %v1243 = vsub.s32 %v1240, %v1242
    %v1244 = vrot.slane %v1230, %v1243
    %v1245 = vcombine.high %v1237, %v1237
    %v1246 = vcombine.high %v1244, %v1244
    %v1247 = vcombine.high %v1223, %v1223
    %v1249 = vunpack.c.l.s4 1983009808
    %v1250 = vunpack.c.0.s8 %v1249
    %v1251 = vlaneseq
    %v1252 = vshrl.u32 %v1251, 7
    %v1253 = vsub.s32 %v1250, %v1252
    %v1254 = vrot.slane %v1223, %v1253
    %v1256 = vunpack.c.l.s4 1983009808
    %v1257 = vunpack.c.0.s8 %v1256
    %v1258 = vlaneseq
    %v1259 = vshrl.u32 %v1258, 7
    %v1260 = vsub.s32 %v1257, %v1259
    %v1261 = vrot.slane %v1247, %v1260
    %v1262 = vcombine.high %v1254, %v1254
    %v1263 = vcombine.high %v1261, %v1261
    %v1264 = vcombine.high %v1224, %v1224
    %v1266 = vunpack.c.l.s4 1983009808
    %v1267 = vunpack.c.0.s8 %v1266
    %v1268 = vlaneseq
    %v1269 = vshrl.u32 %v1268, 7
    %v1270 = vsub.s32 %v1267, %v1269
    %v1271 = vrot.slane %v1224, %v1270
    %v1273 = vunpack.c.l.s4 1983009808
    %v1274 = vunpack.c.0.s8 %v1273
    %v1275 = vlaneseq
    %v1276 = vshrl.u32 %v1275, 7
    %v1277 = vsub.s32 %v1274, %v1276
    %v1278 = vrot.slane %v1264, %v1277
    %v1279 = vcombine.high %v1271, %v1271
    %v1280 = vcombine.high %v1278, %v1278
    %v1281 = vcombine.high %v1225, %v1225
    %v1283 = vunpack.c.l.s4 1983009808
    %v1284 = vunpack.c.0.s8 %v1283
    %v1285 = vlaneseq
    %v1286 = vshrl.u32 %v1285, 7
    %v1287 = vsub.s32 %v1284, %v1286
    %v1288 = vrot.slane %v1225, %v1287
    %v1290 = vunpack.c.l.s4 1983009808
    %v1291 = vunpack.c.0.s8 %v1290
    %v1292 = vlaneseq
    %v1293 = vshrl.u32 %v1292, 7
    %v1294 = vsub.s32 %v1291, %v1293
    %v1295 = vrot.slane %v1281, %v1294
    %v1296 = vcombine.high %v1288, %v1288
    %v1297 = vcombine.high %v1295, %v1295
    %v1298 = vlaneseq
    %v1299 = vshrl.u32 %v1298, 7
    %v1300 = vsub.s32 0, %v1299
    %v1301 = vrot.slane %v1237, %v1300
    %v1302 = vlaneseq
    %v1303 = vshrl.u32 %v1302, 7
    %v1304 = vsub.s32 0, %v1303
    %v1305 = vrot.slane %v1245, %v1304
    %v1306 = vlaneseq
    %v1307 = vshrl.u32 %v1306, 7
    %v1308 = vsub.s32 0, %v1307
    %v1309 = vrot.slane %v1244, %v1308
    %v1310 = vlaneseq
    %v1311 = vshrl.u32 %v1310, 7
    %v1312 = vsub.s32 0, %v1311
    %v1313 = vrot.slane %v1246, %v1312
    %v1314 = vlaneseq
    %v1315 = vshrl.u32 %v1314, 7
    %v1316 = vsub.s32 0, %v1315
    %v1317 = vrot.slane %v1254, %v1316
    %v1318 = vlaneseq
    %v1319 = vshrl.u32 %v1318, 7
    %v1320 = vsub.s32 0, %v1319
    %v1321 = vrot.slane %v1262, %v1320
    %v1322 = vlaneseq
    %v1323 = vshrl.u32 %v1322, 7
    %v1324 = vsub.s32 0, %v1323
    %v1325 = vrot.slane %v1261, %v1324
    %v1326 = vlaneseq
    %v1327 = vshrl.u32 %v1326, 7
    %v1328 = vsub.s32 0, %v1327
    %v1329 = vrot.slane %v1263, %v1328
    %v1330 = vlaneseq
    %v1331 = vshrl.u32 %v1330, 7
    %v1332 = vsub.s32 0, %v1331
    %v1333 = vrot.slane %v1271, %v1332
    %v1334 = vlaneseq
    %v1335 = vshrl.u32 %v1334, 7
    %v1336 = vsub.s32 0, %v1335
    %v1337 = vrot.slane %v1279, %v1336
    %v1338 = vlaneseq
    %v1339 = vshrl.u32 %v1338, 7
    %v1340 = vsub.s32 0, %v1339
    %v1341 = vrot.slane %v1278, %v1340
    %v1342 = vlaneseq
    %v1343 = vshrl.u32 %v1342, 7
    %v1344 = vsub.s32 0, %v1343
    %v1345 = vrot.slane %v1280, %v1344
    %v1346 = vlaneseq
    %v1347 = vshrl.u32 %v1346, 7
    %v1348 = vsub.s32 0, %v1347
    %v1349 = vrot.slane %v1288, %v1348
    %v1350 = vlaneseq
    %v1351 = vshrl.u32 %v1350, 7
    %v1352 = vsub.s32 0, %v1351
    %v1353 = vrot.slane %v1296, %v1352
    %v1354 = vlaneseq
    %v1355 = vshrl.u32 %v1354, 7
    %v1356 = vsub.s32 0, %v1355
    %v1357 = vrot.slane %v1295, %v1356
    %v1358 = vlaneseq
    %v1359 = vshrl.u32 %v1358, 7
    %v1360 = vsub.s32 0, %v1359
    %v1361 = vrot.slane %v1297, %v1360
    %vm1362 = vcmask 1041409
    %v1363 = vsel %vm1362, %v1305, %v1301
    %vm1364 = vcmask 1042434
    %v1365 = vsel %vm1364, %v1309, %v1363
    %vm1366 = vcmask 1043459
    %v1367 = vsel %vm1366, %v1313, %v1365
    %vm1368 = vcmask 1044484
    %v1369 = vsel %vm1368, %v1317, %v1367
    %vm1370 = vcmask 1045509
    %v1371 = vsel %vm1370, %v1321, %v1369
    %vm1372 = vcmask 1046534
    %v1373 = vsel %vm1372, %v1325, %v1371
    %vm1374 = vcmask 1047559
    %v1375 = vsel %vm1374, %v1329, %v1373
    %v1376 = vsel %vm1362, %v1337, %v1333
    %v1377 = vsel %vm1364, %v1341, %v1376
    %v1378 = vsel %vm1366, %v1345, %v1377
    %v1379 = vsel %vm1368, %v1349, %v1378
    %v1380 = vsel %vm1370, %v1353, %v1379
    %v1381 = vsel %vm1372, %v1357, %v1380
    %v1382 = vsel %vm1374, %v1361, %v1381
    %v1385 = vlaneseq
    %v1386 = vshrl.u32 %v1385, 7
    %v1387 = vsub.s32 1, %v1386
    %v1388 = vrot.slane %v1237, %v1387
    %v1389 = vlaneseq
    %v1390 = vshrl.u32 %v1389, 7
    %v1391 = vsub.s32 1, %v1390
    %v1392 = vrot.slane %v1245, %v1391
    %v1393 = vlaneseq
    %v1394 = vshrl.u32 %v1393, 7
    %v1395 = vsub.s32 1, %v1394
    %v1396 = vrot.slane %v1244, %v1395
    %v1397 = vlaneseq
    %v1398 = vshrl.u32 %v1397, 7
    %v1399 = vsub.s32 1, %v1398
    %v1400 = vrot.slane %v1246, %v1399
    %v1401 = vlaneseq
    %v1402 = vshrl.u32 %v1401, 7
    %v1403 = vsub.s32 1, %v1402
    %v1404 = vrot.slane %v1254, %v1403
    %v1405 = vlaneseq
    %v1406 = vshrl.u32 %v1405, 7
    %v1407 = vsub.s32 1, %v1406
    %v1408 = vrot.slane %v1262, %v1407
    %v1409 = vlaneseq
    %v1410 = vshrl.u32 %v1409, 7
    %v1411 = vsub.s32 1, %v1410
    %v1412 = vrot.slane %v1261, %v1411
    %v1413 = vlaneseq
    %v1414 = vshrl.u32 %v1413, 7
    %v1415 = vsub.s32 1, %v1414
    %v1416 = vrot.slane %v1263, %v1415
    %v1417 = vlaneseq
    %v1418 = vshrl.u32 %v1417, 7
    %v1419 = vsub.s32 1, %v1418
    %v1420 = vrot.slane %v1271, %v1419
    %v1421 = vlaneseq
    %v1422 = vshrl.u32 %v1421, 7
    %v1423 = vsub.s32 1, %v1422
    %v1424 = vrot.slane %v1279, %v1423
    %v1425 = vlaneseq
    %v1426 = vshrl.u32 %v1425, 7
    %v1427 = vsub.s32 1, %v1426
    %v1428 = vrot.slane %v1278, %v1427
    %v1429 = vlaneseq
    %v1430 = vshrl.u32 %v1429, 7
    %v1431 = vsub.s32 1, %v1430
    %v1432 = vrot.slane %v1280, %v1431
    %v1433 = vlaneseq
    %v1434 = vshrl.u32 %v1433, 7
    %v1435 = vsub.s32 1, %v1434
    %v1436 = vrot.slane %v1288, %v1435
    %v1437 = vlaneseq
    %v1438 = vshrl.u32 %v1437, 7
    %v1439 = vsub.s32 1, %v1438
    %v1440 = vrot.slane %v1296, %v1439
    %v1441 = vlaneseq
    %v1442 = vshrl.u32 %v1441, 7
    %v1443 = vsub.s32 1, %v1442
    %v1444 = vrot.slane %v1295, %v1443
    %v1445 = vlaneseq
    %v1446 = vshrl.u32 %v1445, 7
    %v1447 = vsub.s32 1, %v1446
    %v1448 = vrot.slane %v1297, %v1447
    %v1449 = vsel %vm1362, %v1392, %v1388
    %v1450 = vsel %vm1364, %v1396, %v1449
    %v1451 = vsel %vm1366, %v1400, %v1450
    %v1452 = vsel %vm1368, %v1404, %v1451
    %v1453 = vsel %vm1370, %v1408, %v1452
    %v1454 = vsel %vm1372, %v1412, %v1453
    %v1455 = vsel %vm1374, %v1416, %v1454
    %v1456 = vsel %vm1362, %v1424, %v1420
    %v1457 = vsel %vm1364, %v1428, %v1456
    %v1458 = vsel %vm1366, %v1432, %v1457
    %v1459 = vsel %vm1368, %v1436, %v1458
    %v1460 = vsel %vm1370, %v1440, %v1459
    %v1461 = vsel %vm1372, %v1444, %v1460
    %v1462 = vsel %vm1374, %v1448, %v1461
    %1463 = vrot.lane.b32.xlu0 %v1455, 64
    %v1464 = vpop.permute.xlu0 %1463
    %1465 = vrot.lane.b32.xlu0 %v1462, 64
    %v1466 = vpop.permute.xlu0 %1465
    %v1469 = vsel %vm209, %v1375, %v1464
    %v1470 = vsel %vm209, %v1382, %v1466
    %1471 = vst [vmem:[#allocation9] sm:$0xff] %v1469
    %1472 = vst [vmem:[#allocation9 + $0x8] sm:$0xff] %v1470
    // Predicated region
    $region50: #{tpu_custom_call.1} parent=1 // pred_check
      _
    $region51: #{tpu_custom_call.1} parent=1 // pred_check_branch
      %1474 = sbr.rel (0) target = $region53
    $region52: #{tpu_custom_call.1} parent=1 // pred_region
      %s1476 = ssub.s32 256, 256
      %1477 = vsyncadd [#allocation5], %s1476
      %s1478 = sshll.u32 [#allocation9], 4
      %s1479 = int_to_ptr.vmem [resolvable:$true] %s1478
      %1484 = dma.vmem_to_hbm [thread:$0]  %s1479, 256, %s9, [#allocation5], 128, 128, 8
    $region53: #{tpu_custom_call.1} parent=1 // pred_fallthru
      _
    // Predicated region
    $region54: #{tpu_custom_call.1} parent=1 // pred_check
      _
    $region55: #{tpu_custom_call.1} parent=1 // pred_check_branch
      %1486 = sbr.rel (0) target = $region57
    $region56: #{tpu_custom_call.1} parent=1 // pred_region
      %1487 = dma.done [#allocation5], 256
    $region57: #{tpu_custom_call.1} parent=1 // pred_fallthru
      _
    %1488 = vsyncpa [#allocation4], 1
    %1489 = vsyncpa [#allocation7], 1
    %1490 = vsyncpa [#allocation5], 1

</llo_original>
